<compile_context>
chip_gen: v7x
topology: tpu7x:2x2x1
jax: 0.10.0
libtpu: 0.0.40
codegen_flags: <defaults>
</compile_context>

<pallas_src>
import functools

import numpy as np
import jax
import jax.numpy as jnp
from jax.experimental import pallas as pl
from jax.experimental.pallas import tpu as pltpu


# ----------------------------------------------------------------------------
# Host-side static per-sample 0/1 selector construction (O(L^2), batch-free)
# ----------------------------------------------------------------------------
def _shift_selectors(l_in, kernel_size):
    """Per-tap (l_in, l_out) 0/1 matrices implementing x[t + p - k] with zero pad.

    ConvTranspose1d(stride=1, padding=p=K//2): y[t] = sum_k x[t + p - k] * w[k].
    Out-of-range source indices map to all-zero columns (the zero padding).
    """
    p = kernel_size // 2
    l_out = l_in + kernel_size - 1 - 2 * p
    sel = np.zeros((kernel_size, l_in, l_out), np.float32)
    for k in range(kernel_size):
        for t in range(l_out):
            s = t + p - k
            if 0 <= s < l_in:
                sel[k, s, t] = 1.0
    return sel


def _upsample_selector(l_in, l_out):
    # PyTorch nn.Upsample(size, mode='nearest'): src = floor(i * l_in / l_out).
    # Integer arithmetic matches the float formula at these sizes; guard if the
    # sizes ever change.
    sel = np.zeros((l_in, l_out), np.float32)
    src = (np.arange(l_out) * l_in) // l_out
    sel[src, np.arange(l_out)] = 1.0
    return sel


def _tile_block_diag(m, tb):
    """I_TB (kron) m — per-sample selector applied independently to each of the
    TB samples packed along the lane dimension of one batch tile."""
    return np.kron(np.eye(tb, dtype=np.float32), m.astype(np.float32))


# ----------------------------------------------------------------------------
# Fused decoder kernel: one batch tile per grid step,
# 3 x (ConvTranspose1d + ReLU + nearest Upsample) entirely in VMEM / vregs.
# ----------------------------------------------------------------------------
def _decoder_tile_kernel(x_ref,
                         w1_ref, b1_ref, r1_ref,
                         w2_ref, b2_ref, r2_ref,
                         w3_ref, b3_ref, r3_ref,
                         u_ref, o_ref, *, kernel_size):
    """One TB-sample batch tile, whole 3-block decoder, one grid step.

    x_ref : (C2, TB*L0)           input tile; channels on sublanes,
                                  tile-batch*length packed on lanes
    wJ_ref: (K, CoutJ, CinJ)      per-tap channel-mixing weights
    bJ_ref: (CoutJ, 1)            bias
    rJ_ref: (K, TB*LinJ, TB*LcJ)  per-tap static 0/1 selectors: zero-pad + tap
                                  shift (+ previous block's nearest upsample),
                                  block-diagonal over the TB-sample tile only
    u_ref : (TB*Lc3, TB*30)       final nearest-upsample selector (tile block-diag)
    o_ref : (Cf, TB*30)           lane-dense output tile
    """
    def block(a, w_ref, b_ref, r_ref):
        acc = None
        for k in range(kernel_size):
            # pad + shift (+ upsample) as one small per-tile 0/1 matmul ...
            col = jnp.dot(a, r_ref[k], preferred_element_type=jnp.float32)
            # ... then channel-mix with the k-th tap's (Cout, Cin) weight slice.
            # Accumulate per tap — no concatenate / im2col copy in VMEM.
            y_k = jnp.dot(w_ref[k], col, preferred_element_type=jnp.float32)
            acc = y_k if acc is None else acc + y_k
        return jnp.maximum(acc + b_ref[...], 0.0)           # bias + ReLU (f32)

    a = x_ref[...].astype(jnp.float32)                      # (C2, TB*L0)
    a = block(a, w1_ref, b1_ref, r1_ref)                    # (C1, TB*Lc1)
    a = block(a, w2_ref, b2_ref, r2_ref)                    # (C0, TB*Lc2)  (upsample->7 folded into r2)
    a = block(a, w3_ref, b3_ref, r3_ref)                    # (Cf, TB*Lc3)  (upsample->15 folded into r3)
    # final nearest-neighbor upsample to 30, lane-dense store
    o_ref[...] = jnp.dot(a, u_ref[...],
                         preferred_element_type=jnp.float32).astype(o_ref.dtype)


@functools.partial(jax.jit,
                   static_argnames=("kernel_size", "upsample_sizes", "batch_tile"))
def fused_decoder(x, w1, b1, w2, b2, w3, b3, *, kernel_size,
                  upsample_sizes=(7, 15, 30), batch_tile=8):
    """x: (B, C2, L0); wJ: torch ConvTranspose1d layout (CinJ, CoutJ, K); bJ: (CoutJ,)."""
    B, c_in0, l0 = x.shape
    K = kernel_size
    p = K // 2
    TB = int(batch_tile)
    nt = -(-B // TB)            # number of batch tiles
    bp = nt * TB                # padded batch

    c1, c0, cf = w1.shape[1], w2.shape[1], w3.shape[1]
    l_out = upsample_sizes[2]

    # conv-transpose output lengths (stride=1, padding=K//2)
    lc1 = l0 + K - 1 - 2 * p
    lc2 = upsample_sizes[0] + K - 1 - 2 * p
    lc3 = upsample_sizes[1] + K - 1 - 2 * p

    # per-sample selectors (batch independent)
    s1 = _shift_selectors(l0, K)
    s2 = _shift_selectors(upsample_sizes[0], K)
    s3 = _shift_selectors(upsample_sizes[1], K)
    u1 = _upsample_selector(lc1, upsample_sizes[0])
    u2 = _upsample_selector(lc2, upsample_sizes[1])
    u3 = _upsample_selector(lc3, upsample_sizes[2])

    # Block-diagonal only over the fixed TB-sample tile (NOT the full batch):
    # per-tile cost O(TB^2 * L^2), total O(B * TB * L^2) — linear in B.
    r1 = np.stack([_tile_block_diag(s1[k], TB) for k in range(K)])
    r2 = np.stack([_tile_block_diag(u1 @ s2[k], TB) for k in range(K)])
    r3 = np.stack([_tile_block_diag(u2 @ s3[k], TB) for k in range(K)])
    u3b = _tile_block_diag(u3, TB)

    def wtap(w):   # torch (Cin, Cout, K) -> per-tap (K, Cout, Cin)
        return jnp.transpose(w, (2, 1, 0))

    # pack: (B, C2, L0) -> (nt, C2, TB*L0); channels on sublanes, tile batch*len on lanes.
    # TODO(synk): at production, fuse this relayout into the producing bottleneck
    # matmul's output layout instead of a standalone transpose.
    xp = jnp.pad(x, ((0, bp - B), (0, 0), (0, 0)))
    x0 = jnp.transpose(xp.reshape(nt, TB, c_in0, l0),
                       (0, 2, 1, 3)).reshape(nt, c_in0, TB * l0)

    args = (x0,
            wtap(w1), b1.reshape(c1, 1), jnp.asarray(r1),
            wtap(w2), b2.reshape(c0, 1), jnp.asarray(r2),
            wtap(w3), b3.reshape(cf, 1), jnp.asarray(r3),
            jnp.asarray(u3b))

    def const_spec(a):
        nd = a.ndim
        # Constant index_map -> fetched once, stays resident across grid steps.
        return pl.BlockSpec(a.shape, lambda n, _nd=nd: (0,) * _nd)

    in_specs = [pl.BlockSpec((None, c_in0, TB * l0), lambda n: (n, 0, 0))]
    in_specs += [const_spec(a) for a in args[1:]]
    out_specs = pl.BlockSpec((None, cf, TB * l_out), lambda n: (n, 0, 0))

    # Explicit VMEM budget: constants + double-buffered IO tiles + slack.
    const_bytes = sum(int(a.size) * a.dtype.itemsize for a in args[1:])
    io_bytes = (c_in0 * TB * l0 + cf * TB * l_out) * x.dtype.itemsize
    vmem_limit = int(min(64 << 20, 2 * (const_bytes + 2 * io_bytes) + (4 << 20)))

    out = pl.pallas_call(
        functools.partial(_decoder_tile_kernel, kernel_size=K),
        out_shape=jax.ShapeDtypeStruct((nt, cf, TB * l_out), x.dtype),
        grid=(nt,),                              # one batch tile per grid step
        in_specs=in_specs,
        out_specs=out_specs,
        compiler_params=pltpu.CompilerParams(
            dimension_semantics=("parallel",),   # tiles independent -> megacore/2nd TC
            vmem_limit_bytes=vmem_limit),
    )(*args)

    # unpack back to PyTorch NCL layout (B, Cf, 30)
    out = jnp.transpose(out.reshape(nt, cf, TB, l_out), (0, 2, 1, 3))
    return out.reshape(bp, cf, l_out)[:B]


# ----------------------------------------------------------------------------
# Decoder module (upsample=True branch, as in the PyTorch default)
# ----------------------------------------------------------------------------
class DecoderPallas:
    def __init__(self, in_channels, out_channels, kernel_size, key, batch_tile=8):
        self.in_channels = in_channels
        self.out_channels = out_channels
        self.kernel_size = kernel_size
        self.batch_tile = batch_tile
        k1, k2, k3, k4, k5, k6 = jax.random.split(key, 6)
        K = kernel_size
        # torch ConvTranspose1d weight shape: (in_channels, out_channels, K)
        self.w1 = 0.1 * jax.random.normal(k1, (out_channels[2], out_channels[1], K), jnp.float32)
        self.b1 = 0.1 * jax.random.normal(k2, (out_channels[1],), jnp.float32)
        self.w2 = 0.1 * jax.random.normal(k3, (out_channels[1], out_channels[0], K), jnp.float32)
        self.b2 = 0.1 * jax.random.normal(k4, (out_channels[0],), jnp.float32)
        self.w3 = 0.1 * jax.random.normal(k5, (out_channels[0], in_channels, K), jnp.float32)
        self.b3 = 0.1 * jax.random.normal(k6, (in_channels,), jnp.float32)

    def __call__(self, x):
        B = x.shape[0]
        x = x.reshape(B, self.out_channels[-1], -1)          # x.view(B, C2, -1)
        return fused_decoder(x, self.w1, self.b1, self.w2, self.b2,
                             self.w3, self.b3,
                             kernel_size=self.kernel_size,
                             upsample_sizes=(7, 15, 30),
                             batch_tile=self.batch_tile)


# ----------------------------------------------------------------------------
# Pure-JAX reference (same math, no Pallas) for a correctness check
# ----------------------------------------------------------------------------
def _ref_block(x, w, b, upsample_size, K):
    p = K // 2
    B, Cin, L = x.shape
    Cout = w.shape[1]
    Lconv = L + K - 1 - 2 * p
    xpad = jnp.pad(x, ((0, 0), (0, 0), (p, p)))
    y = jnp.zeros((B, Cout, Lconv), jnp.float32)
    for k in range(K):
        y = y + jnp.einsum('bct,co->bot',
                           xpad[:, :, 2 * p - k: 2 * p - k + Lconv], w[:, :, k])
    y = jnp.maximum(y + b[None, :, None], 0.0)
    src = (np.arange(upsample_size) * Lconv) // upsample_size
    return y[:, :, src]


def _ref_decoder(dec, x):
    B = x.shape[0]
    x = x.reshape(B, dec.out_channels[-1], -1)
    x = _ref_block(x, dec.w1, dec.b1, 7, dec.kernel_size)
    x = _ref_block(x, dec.w2, dec.b2, 15, dec.kernel_size)
    x = _ref_block(x, dec.w3, dec.b3, 30, dec.kernel_size)
    return x


if __name__ == "__main__":
    key = jax.random.PRNGKey(0)
    k_param, k_in = jax.random.split(key)

    in_channels = 4
    out_channels = [8, 16, 32]       # block1: 32->16, block2: 16->8, block3: 8->4
    kernel_size = 3
    B, latent_len = 2, 4

    dec = DecoderPallas(in_channels, out_channels, kernel_size, k_param, batch_tile=8)

    # input: (B, out_channels[2], latent_len) — forward views it to this shape anyway
    x = jax.random.normal(k_in, (B, out_channels[2], latent_len), jnp.float32)

    out = dec(x)
    out = jax.block_until_ready(out)

    ref = _ref_decoder(dec, x)
    assert out.shape == (B, in_channels, 30), out.shape
    np.testing.assert_allclose(np.asarray(out), np.asarray(ref), rtol=1e-5, atol=1e-5)

    print("KERNEL_OK")
</pallas_src>

<mosaic_0001>
module attributes {stable_mosaic.version = 11 : i64} {
  func.func @_decoder_tile_kernel(%arg0: i32, %arg1: memref<1x32x32xf32, #tpu.memory_space<vmem>>, %arg2: memref<3x16x32xf32, #tpu.memory_space<vmem>>, %arg3: memref<16x1xf32, #tpu.memory_space<vmem>>, %arg4: memref<3x32x32xf32, #tpu.memory_space<vmem>>, %arg5: memref<3x8x16xf32, #tpu.memory_space<vmem>>, %arg6: memref<8x1xf32, #tpu.memory_space<vmem>>, %arg7: memref<3x32x56xf32, #tpu.memory_space<vmem>>, %arg8: memref<3x4x8xf32, #tpu.memory_space<vmem>>, %arg9: memref<4x1xf32, #tpu.memory_space<vmem>>, %arg10: memref<3x56x120xf32, #tpu.memory_space<vmem>>, %arg11: memref<120x240xf32, #tpu.memory_space<vmem>>, %arg12: memref<1x4x240xf32, #tpu.memory_space<vmem>>) attributes {dimension_semantics = [#tpu.dimension_semantics<parallel>], iteration_bounds = array<i64: 1>, scalar_prefetch = 0 : i64, scratch_operands = 0 : i64, tpu.core_type = #tpu.core_type<tc>, window_params = [{transform_indices = @transform_0, window_bounds = array<i64: 1, 32, 32>}, {pipeline_mode = #tpu.pipeline_mode<synchronous>, transform_indices = @transform_1, window_bounds = array<i64: 3, 16, 32>}, {pipeline_mode = #tpu.pipeline_mode<synchronous>, transform_indices = @transform_2, window_bounds = array<i64: 16, 1>}, {pipeline_mode = #tpu.pipeline_mode<synchronous>, transform_indices = @transform_3, window_bounds = array<i64: 3, 32, 32>}, {pipeline_mode = #tpu.pipeline_mode<synchronous>, transform_indices = @transform_4, window_bounds = array<i64: 3, 8, 16>}, {pipeline_mode = #tpu.pipeline_mode<synchronous>, transform_indices = @transform_5, window_bounds = array<i64: 8, 1>}, {pipeline_mode = #tpu.pipeline_mode<synchronous>, transform_indices = @transform_6, window_bounds = array<i64: 3, 32, 56>}, {pipeline_mode = #tpu.pipeline_mode<synchronous>, transform_indices = @transform_7, window_bounds = array<i64: 3, 4, 8>}, {pipeline_mode = #tpu.pipeline_mode<synchronous>, transform_indices = @transform_8, window_bounds = array<i64: 4, 1>}, {pipeline_mode = #tpu.pipeline_mode<synchronous>, transform_indices = @transform_9, window_bounds = array<i64: 3, 56, 120>}, {pipeline_mode = #tpu.pipeline_mode<synchronous>, transform_indices = @transform_10, window_bounds = array<i64: 120, 240>}, {transform_indices = @transform_11, window_bounds = array<i64: 1, 4, 240>}]} {
    %c0 = arith.constant 0 : index
    %c0_0 = arith.constant 0 : index
    %c0_1 = arith.constant 0 : index
    %0 = vector.load %arg1[%c0, %c0_0, %c0_1] : memref<1x32x32xf32, #tpu.memory_space<vmem>>, vector<1x32x32xf32>
    %1 = vector.shape_cast %0 : vector<1x32x32xf32> to vector<32x32xf32>
    %c0_2 = arith.constant 0 : index
    %c0_3 = arith.constant 0 : index
    %c0_4 = arith.constant 0 : index
    %2 = vector.load %arg4[%c0_2, %c0_3, %c0_4] : memref<3x32x32xf32, #tpu.memory_space<vmem>>, vector<1x32x32xf32>
    %3 = vector.shape_cast %2 : vector<1x32x32xf32> to vector<32x32xf32>
    %cst = arith.constant dense<0.000000e+00> : vector<32x32xf32>
    %4 = tpu.matmul %1, %3, %cst {dimension_numbers = #tpu.dot_dimension_numbers<[1], [0], [0], [1], [0, 0, 1, 1], [], []>} : vector<32x32xf32>, vector<32x32xf32>, vector<32x32xf32> -> vector<32x32xf32>
    %c0_5 = arith.constant 0 : index
    %c0_6 = arith.constant 0 : index
    %c0_7 = arith.constant 0 : index
    %5 = vector.load %arg2[%c0_5, %c0_6, %c0_7] : memref<3x16x32xf32, #tpu.memory_space<vmem>>, vector<1x16x32xf32>
    %6 = vector.shape_cast %5 : vector<1x16x32xf32> to vector<16x32xf32>
    %cst_8 = arith.constant dense<0.000000e+00> : vector<16x32xf32>
    %7 = tpu.matmul %6, %4, %cst_8 {dimension_numbers = #tpu.dot_dimension_numbers<[1], [0], [0], [1], [0, 0, 1, 1], [], []>} : vector<16x32xf32>, vector<32x32xf32>, vector<16x32xf32> -> vector<16x32xf32>
    %c1 = arith.constant 1 : index
    %c0_9 = arith.constant 0 : index
    %c0_10 = arith.constant 0 : index
    %8 = vector.load %arg4[%c1, %c0_9, %c0_10] : memref<3x32x32xf32, #tpu.memory_space<vmem>>, vector<1x32x32xf32>
    %9 = vector.shape_cast %8 : vector<1x32x32xf32> to vector<32x32xf32>
    %cst_11 = arith.constant dense<0.000000e+00> : vector<32x32xf32>
    %10 = tpu.matmul %1, %9, %cst_11 {dimension_numbers = #tpu.dot_dimension_numbers<[1], [0], [0], [1], [0, 0, 1, 1], [], []>} : vector<32x32xf32>, vector<32x32xf32>, vector<32x32xf32> -> vector<32x32xf32>
    %c1_12 = arith.constant 1 : index
    %c0_13 = arith.constant 0 : index
    %c0_14 = arith.constant 0 : index
    %11 = vector.load %arg2[%c1_12, %c0_13, %c0_14] : memref<3x16x32xf32, #tpu.memory_space<vmem>>, vector<1x16x32xf32>
    %12 = vector.shape_cast %11 : vector<1x16x32xf32> to vector<16x32xf32>
    %cst_15 = arith.constant dense<0.000000e+00> : vector<16x32xf32>
    %13 = tpu.matmul %12, %10, %cst_15 {dimension_numbers = #tpu.dot_dimension_numbers<[1], [0], [0], [1], [0, 0, 1, 1], [], []>} : vector<16x32xf32>, vector<32x32xf32>, vector<16x32xf32> -> vector<16x32xf32>
    %14 = arith.addf %7, %13 : vector<16x32xf32>
    %c2 = arith.constant 2 : index
    %c0_16 = arith.constant 0 : index
    %c0_17 = arith.constant 0 : index
    %15 = vector.load %arg4[%c2, %c0_16, %c0_17] : memref<3x32x32xf32, #tpu.memory_space<vmem>>, vector<1x32x32xf32>
    %16 = vector.shape_cast %15 : vector<1x32x32xf32> to vector<32x32xf32>
    %cst_18 = arith.constant dense<0.000000e+00> : vector<32x32xf32>
    %17 = tpu.matmul %1, %16, %cst_18 {dimension_numbers = #tpu.dot_dimension_numbers<[1], [0], [0], [1], [0, 0, 1, 1], [], []>} : vector<32x32xf32>, vector<32x32xf32>, vector<32x32xf32> -> vector<32x32xf32>
    %c2_19 = arith.constant 2 : index
    %c0_20 = arith.constant 0 : index
    %c0_21 = arith.constant 0 : index
    %18 = vector.load %arg2[%c2_19, %c0_20, %c0_21] : memref<3x16x32xf32, #tpu.memory_space<vmem>>, vector<1x16x32xf32>
    %19 = vector.shape_cast %18 : vector<1x16x32xf32> to vector<16x32xf32>
    %cst_22 = arith.constant dense<0.000000e+00> : vector<16x32xf32>
    %20 = tpu.matmul %19, %17, %cst_22 {dimension_numbers = #tpu.dot_dimension_numbers<[1], [0], [0], [1], [0, 0, 1, 1], [], []>} : vector<16x32xf32>, vector<32x32xf32>, vector<16x32xf32> -> vector<16x32xf32>
    %21 = arith.addf %14, %20 : vector<16x32xf32>
    %c0_23 = arith.constant 0 : index
    %c0_24 = arith.constant 0 : index
    %22 = vector.load %arg3[%c0_23, %c0_24] : memref<16x1xf32, #tpu.memory_space<vmem>>, vector<16x1xf32>
    %23 = vector.broadcast %22 : vector<16x1xf32> to vector<16x32xf32>
    %24 = arith.addf %21, %23 : vector<16x32xf32>
    %cst_25 = arith.constant 0.000000e+00 : f32
    %25 = vector.broadcast %cst_25 : f32 to vector<16x32xf32>
    %26 = arith.maximumf %24, %25 : vector<16x32xf32>
    %c0_26 = arith.constant 0 : index
    %c0_27 = arith.constant 0 : index
    %c0_28 = arith.constant 0 : index
    %27 = vector.load %arg7[%c0_26, %c0_27, %c0_28] : memref<3x32x56xf32, #tpu.memory_space<vmem>>, vector<1x32x56xf32>
    %28 = vector.shape_cast %27 : vector<1x32x56xf32> to vector<32x56xf32>
    %cst_29 = arith.constant dense<0.000000e+00> : vector<16x56xf32>
    %29 = tpu.matmul %26, %28, %cst_29 {dimension_numbers = #tpu.dot_dimension_numbers<[1], [0], [0], [1], [0, 0, 1, 1], [], []>} : vector<16x32xf32>, vector<32x56xf32>, vector<16x56xf32> -> vector<16x56xf32>
    %c0_30 = arith.constant 0 : index
    %c0_31 = arith.constant 0 : index
    %c0_32 = arith.constant 0 : index
    %30 = vector.load %arg5[%c0_30, %c0_31, %c0_32] : memref<3x8x16xf32, #tpu.memory_space<vmem>>, vector<1x8x16xf32>
    %31 = vector.shape_cast %30 : vector<1x8x16xf32> to vector<8x16xf32>
    %cst_33 = arith.constant dense<0.000000e+00> : vector<8x56xf32>
    %32 = tpu.matmul %31, %29, %cst_33 {dimension_numbers = #tpu.dot_dimension_numbers<[1], [0], [0], [1], [0, 0, 1, 1], [], []>} : vector<8x16xf32>, vector<16x56xf32>, vector<8x56xf32> -> vector<8x56xf32>
    %c1_34 = arith.constant 1 : index
    %c0_35 = arith.constant 0 : index
    %c0_36 = arith.constant 0 : index
    %33 = vector.load %arg7[%c1_34, %c0_35, %c0_36] : memref<3x32x56xf32, #tpu.memory_space<vmem>>, vector<1x32x56xf32>
    %34 = vector.shape_cast %33 : vector<1x32x56xf32> to vector<32x56xf32>
    %cst_37 = arith.constant dense<0.000000e+00> : vector<16x56xf32>
    %35 = tpu.matmul %26, %34, %cst_37 {dimension_numbers = #tpu.dot_dimension_numbers<[1], [0], [0], [1], [0, 0, 1, 1], [], []>} : vector<16x32xf32>, vector<32x56xf32>, vector<16x56xf32> -> vector<16x56xf32>
    %c1_38 = arith.constant 1 : index
    %c0_39 = arith.constant 0 : index
    %c0_40 = arith.constant 0 : index
    %36 = vector.load %arg5[%c1_38, %c0_39, %c0_40] : memref<3x8x16xf32, #tpu.memory_space<vmem>>, vector<1x8x16xf32>
    %37 = vector.shape_cast %36 : vector<1x8x16xf32> to vector<8x16xf32>
    %cst_41 = arith.constant dense<0.000000e+00> : vector<8x56xf32>
    %38 = tpu.matmul %37, %35, %cst_41 {dimension_numbers = #tpu.dot_dimension_numbers<[1], [0], [0], [1], [0, 0, 1, 1], [], []>} : vector<8x16xf32>, vector<16x56xf32>, vector<8x56xf32> -> vector<8x56xf32>
    %39 = arith.addf %32, %38 : vector<8x56xf32>
    %c2_42 = arith.constant 2 : index
    %c0_43 = arith.constant 0 : index
    %c0_44 = arith.constant 0 : index
    %40 = vector.load %arg7[%c2_42, %c0_43, %c0_44] : memref<3x32x56xf32, #tpu.memory_space<vmem>>, vector<1x32x56xf32>
    %41 = vector.shape_cast %40 : vector<1x32x56xf32> to vector<32x56xf32>
    %cst_45 = arith.constant dense<0.000000e+00> : vector<16x56xf32>
    %42 = tpu.matmul %26, %41, %cst_45 {dimension_numbers = #tpu.dot_dimension_numbers<[1], [0], [0], [1], [0, 0, 1, 1], [], []>} : vector<16x32xf32>, vector<32x56xf32>, vector<16x56xf32> -> vector<16x56xf32>
    %c2_46 = arith.constant 2 : index
    %c0_47 = arith.constant 0 : index
    %c0_48 = arith.constant 0 : index
    %43 = vector.load %arg5[%c2_46, %c0_47, %c0_48] : memref<3x8x16xf32, #tpu.memory_space<vmem>>, vector<1x8x16xf32>
    %44 = vector.shape_cast %43 : vector<1x8x16xf32> to vector<8x16xf32>
    %cst_49 = arith.constant dense<0.000000e+00> : vector<8x56xf32>
    %45 = tpu.matmul %44, %42, %cst_49 {dimension_numbers = #tpu.dot_dimension_numbers<[1], [0], [0], [1], [0, 0, 1, 1], [], []>} : vector<8x16xf32>, vector<16x56xf32>, vector<8x56xf32> -> vector<8x56xf32>
    %46 = arith.addf %39, %45 : vector<8x56xf32>
    %c0_50 = arith.constant 0 : index
    %c0_51 = arith.constant 0 : index
    %47 = vector.load %arg6[%c0_50, %c0_51] : memref<8x1xf32, #tpu.memory_space<vmem>>, vector<8x1xf32>
    %48 = vector.broadcast %47 : vector<8x1xf32> to vector<8x56xf32>
    %49 = arith.addf %46, %48 : vector<8x56xf32>
    %cst_52 = arith.constant 0.000000e+00 : f32
    %50 = vector.broadcast %cst_52 : f32 to vector<8x56xf32>
    %51 = arith.maximumf %49, %50 : vector<8x56xf32>
    %c0_53 = arith.constant 0 : index
    %c0_54 = arith.constant 0 : index
    %c0_55 = arith.constant 0 : index
    %52 = vector.load %arg10[%c0_53, %c0_54, %c0_55] : memref<3x56x120xf32, #tpu.memory_space<vmem>>, vector<1x56x120xf32>
    %53 = vector.shape_cast %52 : vector<1x56x120xf32> to vector<56x120xf32>
    %cst_56 = arith.constant dense<0.000000e+00> : vector<8x120xf32>
    %54 = tpu.matmul %51, %53, %cst_56 {dimension_numbers = #tpu.dot_dimension_numbers<[1], [0], [0], [1], [0, 0, 1, 1], [], []>} : vector<8x56xf32>, vector<56x120xf32>, vector<8x120xf32> -> vector<8x120xf32>
    %c0_57 = arith.constant 0 : index
    %c0_58 = arith.constant 0 : index
    %c0_59 = arith.constant 0 : index
    %55 = vector.load %arg8[%c0_57, %c0_58, %c0_59] : memref<3x4x8xf32, #tpu.memory_space<vmem>>, vector<1x4x8xf32>
    %56 = vector.shape_cast %55 : vector<1x4x8xf32> to vector<4x8xf32>
    %cst_60 = arith.constant dense<0.000000e+00> : vector<4x120xf32>
    %57 = tpu.matmul %56, %54, %cst_60 {dimension_numbers = #tpu.dot_dimension_numbers<[1], [0], [0], [1], [0, 0, 1, 1], [], []>} : vector<4x8xf32>, vector<8x120xf32>, vector<4x120xf32> -> vector<4x120xf32>
    %c1_61 = arith.constant 1 : index
    %c0_62 = arith.constant 0 : index
    %c0_63 = arith.constant 0 : index
    %58 = vector.load %arg10[%c1_61, %c0_62, %c0_63] : memref<3x56x120xf32, #tpu.memory_space<vmem>>, vector<1x56x120xf32>
    %59 = vector.shape_cast %58 : vector<1x56x120xf32> to vector<56x120xf32>
    %cst_64 = arith.constant dense<0.000000e+00> : vector<8x120xf32>
    %60 = tpu.matmul %51, %59, %cst_64 {dimension_numbers = #tpu.dot_dimension_numbers<[1], [0], [0], [1], [0, 0, 1, 1], [], []>} : vector<8x56xf32>, vector<56x120xf32>, vector<8x120xf32> -> vector<8x120xf32>
    %c1_65 = arith.constant 1 : index
    %c0_66 = arith.constant 0 : index
    %c0_67 = arith.constant 0 : index
    %61 = vector.load %arg8[%c1_65, %c0_66, %c0_67] : memref<3x4x8xf32, #tpu.memory_space<vmem>>, vector<1x4x8xf32>
    %62 = vector.shape_cast %61 : vector<1x4x8xf32> to vector<4x8xf32>
    %cst_68 = arith.constant dense<0.000000e+00> : vector<4x120xf32>
    %63 = tpu.matmul %62, %60, %cst_68 {dimension_numbers = #tpu.dot_dimension_numbers<[1], [0], [0], [1], [0, 0, 1, 1], [], []>} : vector<4x8xf32>, vector<8x120xf32>, vector<4x120xf32> -> vector<4x120xf32>
    %64 = arith.addf %57, %63 : vector<4x120xf32>
    %c2_69 = arith.constant 2 : index
    %c0_70 = arith.constant 0 : index
    %c0_71 = arith.constant 0 : index
    %65 = vector.load %arg10[%c2_69, %c0_70, %c0_71] : memref<3x56x120xf32, #tpu.memory_space<vmem>>, vector<1x56x120xf32>
    %66 = vector.shape_cast %65 : vector<1x56x120xf32> to vector<56x120xf32>
    %cst_72 = arith.constant dense<0.000000e+00> : vector<8x120xf32>
    %67 = tpu.matmul %51, %66, %cst_72 {dimension_numbers = #tpu.dot_dimension_numbers<[1], [0], [0], [1], [0, 0, 1, 1], [], []>} : vector<8x56xf32>, vector<56x120xf32>, vector<8x120xf32> -> vector<8x120xf32>
    %c2_73 = arith.constant 2 : index
    %c0_74 = arith.constant 0 : index
    %c0_75 = arith.constant 0 : index
    %68 = vector.load %arg8[%c2_73, %c0_74, %c0_75] : memref<3x4x8xf32, #tpu.memory_space<vmem>>, vector<1x4x8xf32>
    %69 = vector.shape_cast %68 : vector<1x4x8xf32> to vector<4x8xf32>
    %cst_76 = arith.constant dense<0.000000e+00> : vector<4x120xf32>
    %70 = tpu.matmul %69, %67, %cst_76 {dimension_numbers = #tpu.dot_dimension_numbers<[1], [0], [0], [1], [0, 0, 1, 1], [], []>} : vector<4x8xf32>, vector<8x120xf32>, vector<4x120xf32> -> vector<4x120xf32>
    %71 = arith.addf %64, %70 : vector<4x120xf32>
    %c0_77 = arith.constant 0 : index
    %c0_78 = arith.constant 0 : index
    %72 = vector.load %arg9[%c0_77, %c0_78] : memref<4x1xf32, #tpu.memory_space<vmem>>, vector<4x1xf32>
    %73 = vector.broadcast %72 : vector<4x1xf32> to vector<4x120xf32>
    %74 = arith.addf %71, %73 : vector<4x120xf32>
    %cst_79 = arith.constant 0.000000e+00 : f32
    %75 = vector.broadcast %cst_79 : f32 to vector<4x120xf32>
    %76 = arith.maximumf %74, %75 : vector<4x120xf32>
    %c0_80 = arith.constant 0 : index
    %c0_81 = arith.constant 0 : index
    %77 = vector.load %arg11[%c0_80, %c0_81] : memref<120x240xf32, #tpu.memory_space<vmem>>, vector<120x240xf32>
    %cst_82 = arith.constant dense<0.000000e+00> : vector<4x240xf32>
    %78 = tpu.matmul %76, %77, %cst_82 {dimension_numbers = #tpu.dot_dimension_numbers<[1], [0], [0], [1], [0, 0, 1, 1], [], []>} : vector<4x120xf32>, vector<120x240xf32>, vector<4x240xf32> -> vector<4x240xf32>
    %c0_83 = arith.constant 0 : index
    %c0_84 = arith.constant 0 : index
    %c0_85 = arith.constant 0 : index
    %79 = vector.load %arg12[%c0_83, %c0_84, %c0_85] : memref<1x4x240xf32, #tpu.memory_space<vmem>>, vector<1x4x240xf32>
    %80 = vector.shape_cast %79 : vector<1x4x240xf32> to vector<4x240xf32>
    %81 = vector.shape_cast %78 : vector<4x240xf32> to vector<1x4x240xf32>
    tpu.vector_store %arg12[%c0_83, %c0_84, %c0_85], %81 {strides = array<i32>} : memref<1x4x240xf32, #tpu.memory_space<vmem>>, vector<1x4x240xf32>,
    return
  }
  func.func @transform_0(%arg0: i32) -> (i32, i32, i32) {
    %c0_i32 = arith.constant 0 : i32
    %c0_i32_0 = arith.constant 0 : i32
    %c0_i32_1 = arith.constant 0 : i32
    return %arg0, %c0_i32, %c0_i32_0 : i32, i32, i32
  }
  func.func @transform_1(%arg0: i32) -> (i32, i32, i32) {
    %c0_i32 = arith.constant 0 : i32
    %c0_i32_0 = arith.constant 0 : i32
    %c0_i32_1 = arith.constant 0 : i32
    %c0_i32_2 = arith.constant 0 : i32
    return %c0_i32, %c0_i32_0, %c0_i32_1 : i32, i32, i32
  }
  func.func @transform_2(%arg0: i32) -> (i32, i32) {
    %c0_i32 = arith.constant 0 : i32
    %c0_i32_0 = arith.constant 0 : i32
    %c0_i32_1 = arith.constant 0 : i32
    return %c0_i32, %c0_i32_0 : i32, i32
  }
  func.func @transform_3(%arg0: i32) -> (i32, i32, i32) {
    %c0_i32 = arith.constant 0 : i32
    %c0_i32_0 = arith.constant 0 : i32
    %c0_i32_1 = arith.constant 0 : i32
    %c0_i32_2 = arith.constant 0 : i32
    return %c0_i32, %c0_i32_0, %c0_i32_1 : i32, i32, i32
  }
  func.func @transform_4(%arg0: i32) -> (i32, i32, i32) {
    %c0_i32 = arith.constant 0 : i32
    %c0_i32_0 = arith.constant 0 : i32
    %c0_i32_1 = arith.constant 0 : i32
    %c0_i32_2 = arith.constant 0 : i32
    return %c0_i32, %c0_i32_0, %c0_i32_1 : i32, i32, i32
  }
  func.func @transform_5(%arg0: i32) -> (i32, i32) {
    %c0_i32 = arith.constant 0 : i32
    %c0_i32_0 = arith.constant 0 : i32
    %c0_i32_1 = arith.constant 0 : i32
    return %c0_i32, %c0_i32_0 : i32, i32
  }
  func.func @transform_6(%arg0: i32) -> (i32, i32, i32) {
    %c0_i32 = arith.constant 0 : i32
    %c0_i32_0 = arith.constant 0 : i32
    %c0_i32_1 = arith.constant 0 : i32
    %c0_i32_2 = arith.constant 0 : i32
    return %c0_i32, %c0_i32_0, %c0_i32_1 : i32, i32, i32
  }
  func.func @transform_7(%arg0: i32) -> (i32, i32, i32) {
    %c0_i32 = arith.constant 0 : i32
    %c0_i32_0 = arith.constant 0 : i32
    %c0_i32_1 = arith.constant 0 : i32
    %c0_i32_2 = arith.constant 0 : i32
    return %c0_i32, %c0_i32_0, %c0_i32_1 : i32, i32, i32
  }
  func.func @transform_8(%arg0: i32) -> (i32, i32) {
    %c0_i32 = arith.constant 0 : i32
    %c0_i32_0 = arith.constant 0 : i32
    %c0_i32_1 = arith.constant 0 : i32
    return %c0_i32, %c0_i32_0 : i32, i32
  }
  func.func @transform_9(%arg0: i32) -> (i32, i32, i32) {
    %c0_i32 = arith.constant 0 : i32
    %c0_i32_0 = arith.constant 0 : i32
    %c0_i32_1 = arith.constant 0 : i32
    %c0_i32_2 = arith.constant 0 : i32
    return %c0_i32, %c0_i32_0, %c0_i32_1 : i32, i32, i32
  }
  func.func @transform_10(%arg0: i32) -> (i32, i32) {
    %c0_i32 = arith.constant 0 : i32
    %c0_i32_0 = arith.constant 0 : i32
    %c0_i32_1 = arith.constant 0 : i32
    return %c0_i32, %c0_i32_0 : i32, i32
  }
  func.func @transform_11(%arg0: i32) -> (i32, i32, i32) {
    %c0_i32 = arith.constant 0 : i32
    %c0_i32_0 = arith.constant 0 : i32
    %c0_i32_1 = arith.constant 0 : i32
    return %arg0, %c0_i32, %c0_i32_0 : i32, i32, i32
  }
}

</mosaic_0001>

<llo_original>
// kernel: fused_decoder.1
$region0: #{fused_decoder.1}
  #allocation0 [shape = 'u32[]', space=smem, size = 0x4, offset = 0x4, fixed_abs, tag = 'smem constant byte address 0x4 - core index']
  #allocation1 [shape = 'u32[144,128]{1,0:T(1,128)}', space=vmem, size = 0x12000, scoped, tag = 'internal scratch']
  %s0 = inlined_call_operand.vmem [shape: f32[1,32,32], index: 0, kind: input, shape index: {}]
  %s1 = inlined_call_operand.hbm [shape: f32[3,16,32], index: 1, kind: input, shape index: {}]
  %s2 = inlined_call_operand.vmem [shape: f32[16,1], index: 2, kind: input, shape index: {}]
  %s3 = inlined_call_operand.hbm [shape: f32[3,32,32], index: 3, kind: input, shape index: {}]
  %s4 = inlined_call_operand.vmem [shape: f32[3,8,16], index: 4, kind: input, shape index: {}]
  %s5 = inlined_call_operand.vmem [shape: f32[8,1], index: 5, kind: input, shape index: {}]
  %s6 = inlined_call_operand.hbm [shape: f32[3,32,56], index: 6, kind: input, shape index: {}]
  %s7 = inlined_call_operand.hbm [shape: f32[3,4,8], index: 7, kind: input, shape index: {}]
  %s8 = inlined_call_operand.vmem [shape: f32[4,1], index: 8, kind: input, shape index: {}]
  %s9 = inlined_call_operand.vmem [shape: f32[3,56,120], index: 9, kind: input, shape index: {}]
  %s10 = inlined_call_operand.hbm [shape: f32[120,240], index: 10, kind: input, shape index: {}]
  %s11 = inlined_call_operand.vmem [shape: f32[1,4,240], index: 11, kind: output, shape index: {}]
  %s12 = sld [smem:[#allocation0]]
  $region74: #{fused_decoder.1} parent=0
    _
  %s14 = ssub.s32 1, %s12
  %s15 = scalar_select 0, %s14, %s12
  $region1: #{fused_decoder.1} parent=0
    #allocation2 [shape = 'u8[24576]{0}', space=vmem, size = 0x6000, scoped, tag = 'input window, operand 1, single buffered']
    #allocation3 [shape = 's32[1]{0}', space=sflag, size = 0x4, scoped, tag = 'scoped memory for fused_decoder.1']
    #allocation4 [shape = 'u8[49152]{0}', space=vmem, size = 0xc000, scoped, tag = 'input window, operand 3, single buffered']
    #allocation5 [shape = 's32[1]{0}', space=sflag, size = 0x4, scoped, tag = 'scoped memory for fused_decoder.1']
    #allocation6 [shape = 'u8[49152]{0}', space=vmem, size = 0xc000, scoped, tag = 'input window, operand 6, single buffered']
    #allocation7 [shape = 'u8[6144]{0}', space=vmem, size = 0x1800, scoped, tag = 'input window, operand 7, single buffered']
    #allocation8 [shape = 's32[1]{0}', space=sflag, size = 0x4, scoped, tag = 'scoped memory for fused_decoder.1']
    #allocation9 [shape = 'u8[122880]{0}', space=vmem, size = 0x1e000, scoped, tag = 'input window, operand 10, single buffered']
    %16 = vsyncpa [#allocation3], 0
    %17 = vsyncpa [#allocation5], 0
    %18 = vsyncpa [#allocation8], 0
    // Predicated region
    $region2: #{fused_decoder.1} parent=1 // pred_check
      _
    $region3: #{fused_decoder.1} parent=1 // pred_check_branch
      %20 = sbr.rel (0) target = $region5
    $region4: #{fused_decoder.1} parent=1 // pred_region
      _
    $region5: #{fused_decoder.1} parent=1 // pred_fallthru
      _
    // Predicated region
    $region6: #{fused_decoder.1} parent=1 // pred_check
      _
    $region7: #{fused_decoder.1} parent=1 // pred_check_branch
      %22 = sbr.rel (0) target = $region9
    $region8: #{fused_decoder.1} parent=1 // pred_region
      %s24 = ssub.s32 768, 768
      %25 = vsyncadd [#allocation3], %s24
      %s26 = sshll.u32 [#allocation2], 4
      %s27 = int_to_ptr.vmem [resolvable:$true] %s26
      %32 = dma.hbm_to_vmem [thread:$0]  %s1, 768, %s27, [#allocation3], 128, 128, 8
    $region9: #{fused_decoder.1} parent=1 // pred_fallthru
      _
    // Predicated region
    $region10: #{fused_decoder.1} parent=1 // pred_check
      _
    $region11: #{fused_decoder.1} parent=1 // pred_check_branch
      %34 = sbr.rel (0) target = $region13
    $region12: #{fused_decoder.1} parent=1 // pred_region
      _
    $region13: #{fused_decoder.1} parent=1 // pred_fallthru
      _
    // Predicated region
    $region14: #{fused_decoder.1} parent=1 // pred_check
      _
    $region15: #{fused_decoder.1} parent=1 // pred_check_branch
      %36 = sbr.rel (0) target = $region17
    $region16: #{fused_decoder.1} parent=1 // pred_region
      %s38 = ssub.s32 1536, 1536
      %39 = vsyncadd [#allocation5], %s38
      %s40 = sshll.u32 [#allocation4], 4
      %s41 = int_to_ptr.vmem [resolvable:$true] %s40
      %46 = dma.hbm_to_vmem [thread:$0]  %s3, 1536, %s41, [#allocation5], 128, 128, 8
    $region17: #{fused_decoder.1} parent=1 // pred_fallthru
      _
    // Predicated region
    $region18: #{fused_decoder.1} parent=1 // pred_check
      _
    $region19: #{fused_decoder.1} parent=1 // pred_check_branch
      %48 = sbr.rel (0) target = $region21
    $region20: #{fused_decoder.1} parent=1 // pred_region
      _
    $region21: #{fused_decoder.1} parent=1 // pred_fallthru
      _
    // Predicated region
    $region22: #{fused_decoder.1} parent=1 // pred_check
      _
    $region23: #{fused_decoder.1} parent=1 // pred_check_branch
      %50 = sbr.rel (0) target = $region25
    $region24: #{fused_decoder.1} parent=1 // pred_region
      _
    $region25: #{fused_decoder.1} parent=1 // pred_fallthru
      _
    // Predicated region
    $region26: #{fused_decoder.1} parent=1 // pred_check
      _
    $region27: #{fused_decoder.1} parent=1 // pred_check_branch
      %52 = sbr.rel (0) target = $region29
    $region28: #{fused_decoder.1} parent=1 // pred_region
      %s54 = ssub.s32 1536, 1536
      %55 = vsyncadd [#allocation5], %s54
      %s56 = sshll.u32 [#allocation6], 4
      %s57 = int_to_ptr.vmem [resolvable:$true] %s56
      %62 = dma.hbm_to_vmem [thread:$0]  %s6, 1536, %s57, [#allocation5], 128, 128, 8
    $region29: #{fused_decoder.1} parent=1 // pred_fallthru
      _
    // Predicated region
    $region30: #{fused_decoder.1} parent=1 // pred_check
      _
    $region31: #{fused_decoder.1} parent=1 // pred_check_branch
      %64 = sbr.rel (0) target = $region33
    $region32: #{fused_decoder.1} parent=1 // pred_region
      %s66 = ssub.s32 192, 192
      %67 = vsyncadd [#allocation8], %s66
      %s68 = sshll.u32 [#allocation7], 4
      %s69 = int_to_ptr.vmem [resolvable:$true] %s68
      %74 = dma.hbm_to_vmem [thread:$0]  %s7, 192, %s69, [#allocation8], 64, 64, 4
    $region33: #{fused_decoder.1} parent=1 // pred_fallthru
      _
    // Predicated region
    $region34: #{fused_decoder.1} parent=1 // pred_check
      _
    $region35: #{fused_decoder.1} parent=1 // pred_check_branch
      %76 = sbr.rel (0) target = $region37
    $region36: #{fused_decoder.1} parent=1 // pred_region
      _
    $region37: #{fused_decoder.1} parent=1 // pred_fallthru
      _
    // Predicated region
    $region38: #{fused_decoder.1} parent=1 // pred_check
      _
    $region39: #{fused_decoder.1} parent=1 // pred_check_branch
      %78 = sbr.rel (0) target = $region41
    $region40: #{fused_decoder.1} parent=1 // pred_region
      _
    $region41: #{fused_decoder.1} parent=1 // pred_fallthru
      _
    // Predicated region
    $region42: #{fused_decoder.1} parent=1 // pred_check
      _
    $region43: #{fused_decoder.1} parent=1 // pred_check_branch
      %80 = sbr.rel (0) target = $region45
    $region44: #{fused_decoder.1} parent=1 // pred_region
      %s82 = ssub.s32 3840, 3840
      %83 = vsyncadd [#allocation8], %s82
      %s84 = sshll.u32 [#allocation9], 4
      %s85 = int_to_ptr.vmem [resolvable:$true] %s84
      %90 = dma.hbm_to_vmem [thread:$0]  %s10, 3840, %s85, [#allocation8], 256, 256, 16
    $region45: #{fused_decoder.1} parent=1 // pred_fallthru
      _
    // Predicated region
    $region46: #{fused_decoder.1} parent=1 // pred_check
      _
    $region47: #{fused_decoder.1} parent=1 // pred_check_branch
      %92 = sbr.rel (0) target = $region49
    $region48: #{fused_decoder.1} parent=1 // pred_region
      %93 = dma.done [#allocation3], 768
    $region49: #{fused_decoder.1} parent=1 // pred_fallthru
      _
    // Predicated region
    $region50: #{fused_decoder.1} parent=1 // pred_check
      _
    $region51: #{fused_decoder.1} parent=1 // pred_check_branch
      %95 = sbr.rel (0) target = $region53
    $region52: #{fused_decoder.1} parent=1 // pred_region
      %96 = dma.done [#allocation5], 1536
    $region53: #{fused_decoder.1} parent=1 // pred_fallthru
      _
    // Predicated region
    $region54: #{fused_decoder.1} parent=1 // pred_check
      _
    $region55: #{fused_decoder.1} parent=1 // pred_check_branch
      %98 = sbr.rel (0) target = $region57
    $region56: #{fused_decoder.1} parent=1 // pred_region
      %99 = dma.done [#allocation5], 1536
    $region57: #{fused_decoder.1} parent=1 // pred_fallthru
      _
    // Predicated region
    $region58: #{fused_decoder.1} parent=1 // pred_check
      _
    $region59: #{fused_decoder.1} parent=1 // pred_check_branch
      %101 = sbr.rel (0) target = $region61
    $region60: #{fused_decoder.1} parent=1 // pred_region
      %102 = dma.done [#allocation8], 192
    $region61: #{fused_decoder.1} parent=1 // pred_fallthru
      _
    // Predicated region
    $region62: #{fused_decoder.1} parent=1 // pred_check
      _
    $region63: #{fused_decoder.1} parent=1 // pred_check_branch
      %104 = sbr.rel (0) target = $region65
    $region64: #{fused_decoder.1} parent=1 // pred_region
      %105 = dma.done [#allocation8], 3840
    $region65: #{fused_decoder.1} parent=1 // pred_fallthru
      _
    %v106 = vld [vmem:[%s0] sm:$0xff]
    %v107 = vld [vmem:[%s0 + $0x8] sm:$0xff]
    %v108 = vld [vmem:[%s0 + $0x10] sm:$0xff]
    %v109 = vld [vmem:[%s0 + $0x18] sm:$0xff]
    %v110 = vld [vmem:[#allocation4] sm:$0xff]
    %v111 = vld [vmem:[#allocation4 + $0x8] sm:$0xff]
    %v112 = vld [vmem:[#allocation4 + $0x10] sm:$0xff]
    %v113 = vld [vmem:[#allocation4 + $0x18] sm:$0xff]
    %vm114 = vcmask 261120
    %v116 = vsel %vm114, %v106, 0
    %v119 = vsel %vm114, %v107, 0
    %v122 = vsel %vm114, %v108, 0
    %v125 = vsel %vm114, %v109, 0
    %127 = vmatprep.subr.mxu0 0.0
    %128 = vmatpush1.msra.mxu0 %v110
    %129 = vmatprep.subr.mxu0 0.0
    %130 = vmatpush1.msra.mxu0 %v111
    %131 = vmatprep.subr.mxu0 0.0
    %132 = vmatpush1.msra.mxu0 %v112
    %133 = vmatprep.subr.mxu0 0.0
    %134 = vmatpush1.msra.mxu0 %v113
    %135 = vmatprep.subr.mxu0 0.0
    %136 = vmatpush1.msra.mxu0 0.0
    %137 = vmatprep.subr.mxu0 0.0
    %138 = vmatpush1.msra.mxu0 0.0
    %139 = vmatprep.subr.mxu0 0.0
    %140 = vmatpush1.msra.mxu0 0.0
    %141 = vmatprep.subr.mxu0 0.0
    %142 = vmatpush1.msra.mxu0 0.0
    %143 = vmatprep.subr.mxu0 0.0
    %144 = vmatpush1.msra.mxu0 0.0
    %145 = vmatprep.subr.mxu0 0.0
    %146 = vmatpush1.msra.mxu0 0.0
    %147 = vmatprep.subr.mxu0 0.0
    %148 = vmatpush1.msra.mxu0 0.0
    %149 = vmatprep.subr.mxu0 0.0
    %150 = vmatpush1.msra.mxu0 0.0
    %151 = vmatprep.subr.mxu0 0.0
    %152 = vmatpush1.msra.mxu0 0.0
    %153 = vmatprep.subr.mxu0 0.0
    %154 = vmatpush1.msra.mxu0 0.0
    %155 = vmatprep.subr.mxu0 0.0
    %156 = vmatpush1.msra.mxu0 0.0
    %157 = vmatprep.subr.mxu0 0.0
    %158 = vmatpush1.msra.mxu0 0.0
    %159 = vmatprep.subr.mxu0 0.0
    %160 = vmatpush1.msra.mxu0 0.0
    %161 = vmatprep.subr.mxu0 0.0
    %162 = vmatpush1.msra.mxu0 0.0
    %163 = vmatprep.subr.mxu0 0.0
    %164 = vmatpush1.msra.mxu0 0.0
    %165 = vmatprep.subr.mxu0 0.0
    %166 = vmatpush1.msra.mxu0 0.0
    %167 = vmatprep.subr.mxu0 0.0
    %168 = vmatpush1.msra.mxu0 0.0
    %169 = vmatprep.subr.mxu0 0.0
    %170 = vmatpush1.msra.mxu0 0.0
    %171 = vmatprep.subr.mxu0 0.0
    %172 = vmatpush1.msra.mxu0 0.0
    %173 = vmatprep.subr.mxu0 0.0
    %174 = vmatpush1.msra.mxu0 0.0
    %175 = vmatprep.subr.mxu0 0.0
    %176 = vmatpush1.msra.mxu0 0.0
    %177 = vmatprep.subr.mxu0 0.0
    %178 = vmatpush1.msra.mxu0 0.0
    %179 = vmatprep.subr.mxu0 0.0
    %180 = vmatpush1.msra.mxu0 0.0
    %181 = vmatprep.subr.mxu0 0.0
    %182 = vmatpush1.msra.mxu0 0.0
    %183 = vmatprep.subr.mxu0 0.0
    %184 = vmatpush1.msra.mxu0 0.0
    %185 = vmatprep.subr.mxu0 0.0
    %186 = vmatpush1.msra.mxu0 0.0
    %187 = vmatprep.subr.mxu0 0.0
    %188 = vmatpush1.msra.mxu0 0.0
    %189 = vmatprep.subr.mxu0 0.0
    %190 = vmatpush1.msra.mxu0 0.0
    %191 = vmatprep.mubr.f32.mxu0 0.0
    %192 = vmatmul.mubr.f32.gmra.mrb[0].mxu0 %v116
    %v193 = vpop.f32.mrb[0].mxu0
    %v194 = vadd.f32 0.0, %v193
    %v195 = vpop.f32.mrb[0].mxu0
    %196 = vmatprep.mubr.f32.mxu0 0.0
    %197 = vmatmul.mubr.f32.gmra.mrb[0].mxu0 %v119
    %v198 = vpop.f32.mrb[0].mxu0
    %v199 = vadd.f32 0.0, %v198
    %v200 = vpop.f32.mrb[0].mxu0
    %201 = vmatprep.mubr.f32.mxu0 0.0
    %202 = vmatmul.mubr.f32.gmra.mrb[0].mxu0 %v122
    %v203 = vpop.f32.mrb[0].mxu0
    %v204 = vadd.f32 0.0, %v203
    %v205 = vpop.f32.mrb[0].mxu0
    %206 = vmatprep.mubr.f32.mxu0 0.0
    %207 = vmatmul.mubr.f32.gmra.mrb[0].mxu0 %v125
    %v208 = vpop.f32.mrb[0].mxu0
    %v209 = vadd.f32 0.0, %v208
    %v210 = vpop.f32.mrb[0].mxu0
    %211 = vdwg.mxu0
    %v212 = vld [vmem:[#allocation2] sm:$0xff]
    %v213 = vld [vmem:[#allocation2 + $0x8] sm:$0xff]
    %s214 = scalar_lea.vmem [#allocation4], 32
    %v215 = vld [vmem:[%s214] sm:$0xff]
    %v216 = vld [vmem:[%s214 + $0x8] sm:$0xff]
    %v217 = vld [vmem:[%s214 + $0x10] sm:$0xff]
    %v218 = vld [vmem:[%s214 + $0x18] sm:$0xff]
    %219 = vmatprep.subr.mxu0 0.0
    %220 = vmatpush1.msra.mxu0 %v215
    %221 = vmatprep.subr.mxu0 0.0
    %222 = vmatpush1.msra.mxu0 %v216
    %223 = vmatprep.subr.mxu0 0.0
    %224 = vmatpush1.msra.mxu0 %v217
    %225 = vmatprep.subr.mxu0 0.0
    %226 = vmatpush1.msra.mxu0 %v218
    %227 = vmatprep.subr.mxu0 0.0
    %228 = vmatpush1.msra.mxu0 0.0
    %229 = vmatprep.subr.mxu0 0.0
    %230 = vmatpush1.msra.mxu0 0.0
    %231 = vmatprep.subr.mxu0 0.0
    %232 = vmatpush1.msra.mxu0 0.0
    %233 = vmatprep.subr.mxu0 0.0
    %234 = vmatpush1.msra.mxu0 0.0
    %235 = vmatprep.subr.mxu0 0.0
    %236 = vmatpush1.msra.mxu0 0.0
    %237 = vmatprep.subr.mxu0 0.0
    %238 = vmatpush1.msra.mxu0 0.0
    %239 = vmatprep.subr.mxu0 0.0
    %240 = vmatpush1.msra.mxu0 0.0
    %241 = vmatprep.subr.mxu0 0.0
    %242 = vmatpush1.msra.mxu0 0.0
    %243 = vmatprep.subr.mxu0 0.0
    %244 = vmatpush1.msra.mxu0 0.0
    %245 = vmatprep.subr.mxu0 0.0
    %246 = vmatpush1.msra.mxu0 0.0
    %247 = vmatprep.subr.mxu0 0.0
    %248 = vmatpush1.msra.mxu0 0.0
    %249 = vmatprep.subr.mxu0 0.0
    %250 = vmatpush1.msra.mxu0 0.0
    %251 = vmatprep.subr.mxu0 0.0
    %252 = vmatpush1.msra.mxu0 0.0
    %253 = vmatprep.subr.mxu0 0.0
    %254 = vmatpush1.msra.mxu0 0.0
    %255 = vmatprep.subr.mxu0 0.0
    %256 = vmatpush1.msra.mxu0 0.0
    %257 = vmatprep.subr.mxu0 0.0
    %258 = vmatpush1.msra.mxu0 0.0
    %259 = vmatprep.subr.mxu0 0.0
    %260 = vmatpush1.msra.mxu0 0.0
    %261 = vmatprep.subr.mxu0 0.0
    %262 = vmatpush1.msra.mxu0 0.0
    %263 = vmatprep.subr.mxu0 0.0
    %264 = vmatpush1.msra.mxu0 0.0
    %265 = vmatprep.subr.mxu0 0.0
    %266 = vmatpush1.msra.mxu0 0.0
    %267 = vmatprep.subr.mxu0 0.0
    %268 = vmatpush1.msra.mxu0 0.0
    %269 = vmatprep.subr.mxu0 0.0
    %270 = vmatpush1.msra.mxu0 0.0
    %271 = vmatprep.subr.mxu0 0.0
    %272 = vmatpush1.msra.mxu0 0.0
    %273 = vmatprep.subr.mxu0 0.0
    %274 = vmatpush1.msra.mxu0 0.0
    %275 = vmatprep.subr.mxu0 0.0
    %276 = vmatpush1.msra.mxu0 0.0
    %277 = vmatprep.subr.mxu0 0.0
    %278 = vmatpush1.msra.mxu0 0.0
    %279 = vmatprep.subr.mxu0 0.0
    %280 = vmatpush1.msra.mxu0 0.0
    %281 = vmatprep.subr.mxu0 0.0
    %282 = vmatpush1.msra.mxu0 0.0
    %283 = vmatprep.mubr.f32.mxu0 0.0
    %284 = vmatmul.mubr.f32.gmra.mrb[0].mxu0 %v116
    %v285 = vpop.f32.mrb[0].mxu0
    %v286 = vadd.f32 0.0, %v285
    %v287 = vpop.f32.mrb[0].mxu0
    %288 = vmatprep.mubr.f32.mxu0 0.0
    %289 = vmatmul.mubr.f32.gmra.mrb[0].mxu0 %v119
    %v290 = vpop.f32.mrb[0].mxu0
    %v291 = vadd.f32 0.0, %v290
    %v292 = vpop.f32.mrb[0].mxu0
    %293 = vmatprep.mubr.f32.mxu0 0.0
    %294 = vmatmul.mubr.f32.gmra.mrb[0].mxu0 %v122
    %v295 = vpop.f32.mrb[0].mxu0
    %v296 = vadd.f32 0.0, %v295
    %v297 = vpop.f32.mrb[0].mxu0
    %298 = vmatprep.mubr.f32.mxu0 0.0
    %299 = vmatmul.mubr.f32.gmra.mrb[0].mxu0 %v125
    %v300 = vpop.f32.mrb[0].mxu0
    %v301 = vadd.f32 0.0, %v300
    %v302 = vpop.f32.mrb[0].mxu0
    %303 = vdwg.mxu0
    %s304 = scalar_lea.vmem [#allocation2], 16
    %v305 = vld [vmem:[%s304] sm:$0xff]
    %v306 = vld [vmem:[%s304 + $0x8] sm:$0xff]
    %v308 = vsel %vm114, %v305, 0
    %v311 = vsel %vm114, %v306, 0
    %313 = vmatprep.subr.mxu0 0.0
    %314 = vmatpush1.msra.mxu0 %v286
    %315 = vmatprep.subr.mxu0 0.0
    %316 = vmatpush1.msra.mxu0 %v291
    %317 = vmatprep.subr.mxu0 0.0
    %318 = vmatpush1.msra.mxu0 %v296
    %319 = vmatprep.subr.mxu0 0.0
    %320 = vmatpush1.msra.mxu0 %v301
    %321 = vmatprep.subr.mxu0 0.0
    %322 = vmatpush1.msra.mxu0 0.0
    %323 = vmatprep.subr.mxu0 0.0
    %324 = vmatpush1.msra.mxu0 0.0
    %325 = vmatprep.subr.mxu0 0.0
    %326 = vmatpush1.msra.mxu0 0.0
    %327 = vmatprep.subr.mxu0 0.0
    %328 = vmatpush1.msra.mxu0 0.0
    %329 = vmatprep.subr.mxu0 0.0
    %330 = vmatpush1.msra.mxu0 0.0
    %331 = vmatprep.subr.mxu0 0.0
    %332 = vmatpush1.msra.mxu0 0.0
    %333 = vmatprep.subr.mxu0 0.0
    %334 = vmatpush1.msra.mxu0 0.0
    %335 = vmatprep.subr.mxu0 0.0
    %336 = vmatpush1.msra.mxu0 0.0
    %337 = vmatprep.subr.mxu0 0.0
    %338 = vmatpush1.msra.mxu0 0.0
    %339 = vmatprep.subr.mxu0 0.0
    %340 = vmatpush1.msra.mxu0 0.0
    %341 = vmatprep.subr.mxu0 0.0
    %342 = vmatpush1.msra.mxu0 0.0
    %343 = vmatprep.subr.mxu0 0.0
    %344 = vmatpush1.msra.mxu0 0.0
    %345 = vmatprep.subr.mxu0 0.0
    %346 = vmatpush1.msra.mxu0 0.0
    %347 = vmatprep.subr.mxu0 0.0
    %348 = vmatpush1.msra.mxu0 0.0
    %349 = vmatprep.subr.mxu0 0.0
    %350 = vmatpush1.msra.mxu0 0.0
    %351 = vmatprep.subr.mxu0 0.0
    %352 = vmatpush1.msra.mxu0 0.0
    %353 = vmatprep.subr.mxu0 0.0
    %354 = vmatpush1.msra.mxu0 0.0
    %355 = vmatprep.subr.mxu0 0.0
    %356 = vmatpush1.msra.mxu0 0.0
    %357 = vmatprep.subr.mxu0 0.0
    %358 = vmatpush1.msra.mxu0 0.0
    %359 = vmatprep.subr.mxu0 0.0
    %360 = vmatpush1.msra.mxu0 0.0
    %361 = vmatprep.subr.mxu0 0.0
    %362 = vmatpush1.msra.mxu0 0.0
    %363 = vmatprep.subr.mxu0 0.0
    %364 = vmatpush1.msra.mxu0 0.0
    %365 = vmatprep.subr.mxu0 0.0
    %366 = vmatpush1.msra.mxu0 0.0
    %367 = vmatprep.subr.mxu0 0.0
    %368 = vmatpush1.msra.mxu0 0.0
    %369 = vmatprep.subr.mxu0 0.0
    %370 = vmatpush1.msra.mxu0 0.0
    %371 = vmatprep.subr.mxu0 0.0
    %372 = vmatpush1.msra.mxu0 0.0
    %373 = vmatprep.subr.mxu0 0.0
    %374 = vmatpush1.msra.mxu0 0.0
    %375 = vmatprep.subr.mxu0 0.0
    %376 = vmatpush1.msra.mxu0 0.0
    %377 = vmatprep.mubr.f32.mxu0 0.0
    %378 = vmatmul.mubr.f32.gmra.mrb[0].mxu0 %v308
    %v379 = vpop.f32.mrb[0].mxu0
    %v380 = vadd.f32 0.0, %v379
    %v381 = vpop.f32.mrb[0].mxu0
    %382 = vmatprep.mubr.f32.mxu0 0.0
    %383 = vmatmul.mubr.f32.gmra.mrb[0].mxu0 %v311
    %v384 = vpop.f32.mrb[0].mxu0
    %v385 = vadd.f32 0.0, %v384
    %v386 = vpop.f32.mrb[0].mxu0
    %387 = vdwg.mxu0
    %v389 = vsel %vm114, %v212, 0
    %v392 = vsel %vm114, %v213, 0
    %394 = vmatprep.subr.mxu0 0.0
    %395 = vmatpush1.msra.mxu0 %v194
    %396 = vmatprep.subr.mxu0 0.0
    %397 = vmatpush1.msra.mxu0 %v199
    %398 = vmatprep.subr.mxu0 0.0
    %399 = vmatpush1.msra.mxu0 %v204
    %400 = vmatprep.subr.mxu0 0.0
    %401 = vmatpush1.msra.mxu0 %v209
    %402 = vmatprep.subr.mxu0 0.0
    %403 = vmatpush1.msra.mxu0 0.0
    %404 = vmatprep.subr.mxu0 0.0
    %405 = vmatpush1.msra.mxu0 0.0
    %406 = vmatprep.subr.mxu0 0.0
    %407 = vmatpush1.msra.mxu0 0.0
    %408 = vmatprep.subr.mxu0 0.0
    %409 = vmatpush1.msra.mxu0 0.0
    %410 = vmatprep.subr.mxu0 0.0
    %411 = vmatpush1.msra.mxu0 0.0
    %412 = vmatprep.subr.mxu0 0.0
    %413 = vmatpush1.msra.mxu0 0.0
    %414 = vmatprep.subr.mxu0 0.0
    %415 = vmatpush1.msra.mxu0 0.0
    %416 = vmatprep.subr.mxu0 0.0
    %417 = vmatpush1.msra.mxu0 0.0
    %418 = vmatprep.subr.mxu0 0.0
    %419 = vmatpush1.msra.mxu0 0.0
    %420 = vmatprep.subr.mxu0 0.0
    %421 = vmatpush1.msra.mxu0 0.0
    %422 = vmatprep.subr.mxu0 0.0
    %423 = vmatpush1.msra.mxu0 0.0
    %424 = vmatprep.subr.mxu0 0.0
    %425 = vmatpush1.msra.mxu0 0.0
    %426 = vmatprep.subr.mxu0 0.0
    %427 = vmatpush1.msra.mxu0 0.0
    %428 = vmatprep.subr.mxu0 0.0
    %429 = vmatpush1.msra.mxu0 0.0
    %430 = vmatprep.subr.mxu0 0.0
    %431 = vmatpush1.msra.mxu0 0.0
    %432 = vmatprep.subr.mxu0 0.0
    %433 = vmatpush1.msra.mxu0 0.0
    %434 = vmatprep.subr.mxu0 0.0
    %435 = vmatpush1.msra.mxu0 0.0
    %436 = vmatprep.subr.mxu0 0.0
    %437 = vmatpush1.msra.mxu0 0.0
    %438 = vmatprep.subr.mxu0 0.0
    %439 = vmatpush1.msra.mxu0 0.0
    %440 = vmatprep.subr.mxu0 0.0
    %441 = vmatpush1.msra.mxu0 0.0
    %442 = vmatprep.subr.mxu0 0.0
    %443 = vmatpush1.msra.mxu0 0.0
    %444 = vmatprep.subr.mxu0 0.0
    %445 = vmatpush1.msra.mxu0 0.0
    %446 = vmatprep.subr.mxu0 0.0
    %447 = vmatpush1.msra.mxu0 0.0
    %448 = vmatprep.subr.mxu0 0.0
    %449 = vmatpush1.msra.mxu0 0.0
    %450 = vmatprep.subr.mxu0 0.0
    %451 = vmatpush1.msra.mxu0 0.0
    %452 = vmatprep.subr.mxu0 0.0
    %453 = vmatpush1.msra.mxu0 0.0
    %454 = vmatprep.subr.mxu0 0.0
    %455 = vmatpush1.msra.mxu0 0.0
    %456 = vmatprep.subr.mxu0 0.0
    %457 = vmatpush1.msra.mxu0 0.0
    %458 = vmatprep.mubr.f32.mxu0 0.0
    %459 = vmatmul.mubr.f32.gmra.mrb[0].mxu0 %v389
    %v460 = vpop.f32.mrb[0].mxu0
    %v461 = vadd.f32 %v380, %v460
    %v462 = vpop.f32.mrb[0].mxu0
    %463 = vmatprep.mubr.f32.mxu0 0.0
    %464 = vmatmul.mubr.f32.gmra.mrb[0].mxu0 %v392
    %v465 = vpop.f32.mrb[0].mxu0
    %v466 = vadd.f32 %v385, %v465
    %v467 = vpop.f32.mrb[0].mxu0
    %468 = vdwg.mxu0
    %s469 = scalar_lea.vmem [#allocation4], 64
    %v470 = vld [vmem:[%s469] sm:$0xff]
    %v471 = vld [vmem:[%s469 + $0x8] sm:$0xff]
    %v472 = vld [vmem:[%s469 + $0x10] sm:$0xff]
    %v473 = vld [vmem:[%s469 + $0x18] sm:$0xff]
    %474 = vmatprep.subr.mxu0 0.0
    %475 = vmatpush1.msra.mxu0 %v470
    %476 = vmatprep.subr.mxu0 0.0
    %477 = vmatpush1.msra.mxu0 %v471
    %478 = vmatprep.subr.mxu0 0.0
    %479 = vmatpush1.msra.mxu0 %v472
    %480 = vmatprep.subr.mxu0 0.0
    %481 = vmatpush1.msra.mxu0 %v473
    %482 = vmatprep.subr.mxu0 0.0
    %483 = vmatpush1.msra.mxu0 0.0
    %484 = vmatprep.subr.mxu0 0.0
    %485 = vmatpush1.msra.mxu0 0.0
    %486 = vmatprep.subr.mxu0 0.0
    %487 = vmatpush1.msra.mxu0 0.0
    %488 = vmatprep.subr.mxu0 0.0
    %489 = vmatpush1.msra.mxu0 0.0
    %490 = vmatprep.subr.mxu0 0.0
    %491 = vmatpush1.msra.mxu0 0.0
    %492 = vmatprep.subr.mxu0 0.0
    %493 = vmatpush1.msra.mxu0 0.0
    %494 = vmatprep.subr.mxu0 0.0
    %495 = vmatpush1.msra.mxu0 0.0
    %496 = vmatprep.subr.mxu0 0.0
    %497 = vmatpush1.msra.mxu0 0.0
    %498 = vmatprep.subr.mxu0 0.0
    %499 = vmatpush1.msra.mxu0 0.0
    %500 = vmatprep.subr.mxu0 0.0
    %501 = vmatpush1.msra.mxu0 0.0
    %502 = vmatprep.subr.mxu0 0.0
    %503 = vmatpush1.msra.mxu0 0.0
    %504 = vmatprep.subr.mxu0 0.0
    %505 = vmatpush1.msra.mxu0 0.0
    %506 = vmatprep.subr.mxu0 0.0
    %507 = vmatpush1.msra.mxu0 0.0
    %508 = vmatprep.subr.mxu0 0.0
    %509 = vmatpush1.msra.mxu0 0.0
    %510 = vmatprep.subr.mxu0 0.0
    %511 = vmatpush1.msra.mxu0 0.0
    %512 = vmatprep.subr.mxu0 0.0
    %513 = vmatpush1.msra.mxu0 0.0
    %514 = vmatprep.subr.mxu0 0.0
    %515 = vmatpush1.msra.mxu0 0.0
    %516 = vmatprep.subr.mxu0 0.0
    %517 = vmatpush1.msra.mxu0 0.0
    %518 = vmatprep.subr.mxu0 0.0
    %519 = vmatpush1.msra.mxu0 0.0
    %520 = vmatprep.subr.mxu0 0.0
    %521 = vmatpush1.msra.mxu0 0.0
    %522 = vmatprep.subr.mxu0 0.0
    %523 = vmatpush1.msra.mxu0 0.0
    %524 = vmatprep.subr.mxu0 0.0
    %525 = vmatpush1.msra.mxu0 0.0
    %526 = vmatprep.subr.mxu0 0.0
    %527 = vmatpush1.msra.mxu0 0.0
    %528 = vmatprep.subr.mxu0 0.0
    %529 = vmatpush1.msra.mxu0 0.0
    %530 = vmatprep.subr.mxu0 0.0
    %531 = vmatpush1.msra.mxu0 0.0
    %532 = vmatprep.subr.mxu0 0.0
    %533 = vmatpush1.msra.mxu0 0.0
    %534 = vmatprep.subr.mxu0 0.0
    %535 = vmatpush1.msra.mxu0 0.0
    %536 = vmatprep.subr.mxu0 0.0
    %537 = vmatpush1.msra.mxu0 0.0
    %538 = vmatprep.mubr.f32.mxu0 0.0
    %539 = vmatmul.mubr.f32.gmra.mrb[0].mxu0 %v116
    %v540 = vpop.f32.mrb[0].mxu0
    %v541 = vadd.f32 0.0, %v540
    %v542 = vpop.f32.mrb[0].mxu0
    %543 = vmatprep.mubr.f32.mxu0 0.0
    %544 = vmatmul.mubr.f32.gmra.mrb[0].mxu0 %v119
    %v545 = vpop.f32.mrb[0].mxu0
    %v546 = vadd.f32 0.0, %v545
    %v547 = vpop.f32.mrb[0].mxu0
    %548 = vmatprep.mubr.f32.mxu0 0.0
    %549 = vmatmul.mubr.f32.gmra.mrb[0].mxu0 %v122
    %v550 = vpop.f32.mrb[0].mxu0
    %v551 = vadd.f32 0.0, %v550
    %v552 = vpop.f32.mrb[0].mxu0
    %553 = vmatprep.mubr.f32.mxu0 0.0
    %554 = vmatmul.mubr.f32.gmra.mrb[0].mxu0 %v125
    %v555 = vpop.f32.mrb[0].mxu0
    %v556 = vadd.f32 0.0, %v555
    %v557 = vpop.f32.mrb[0].mxu0
    %558 = vdwg.mxu0
    %s559 = scalar_lea.vmem [#allocation2], 32
    %v560 = vld [vmem:[%s559] sm:$0xff]
    %v561 = vld [vmem:[%s559 + $0x8] sm:$0xff]
    %v563 = vsel %vm114, %v560, 0
    %v566 = vsel %vm114, %v561, 0
    %568 = vmatprep.subr.mxu0 0.0
    %569 = vmatpush1.msra.mxu0 %v541
    %570 = vmatprep.subr.mxu0 0.0
    %571 = vmatpush1.msra.mxu0 %v546
    %572 = vmatprep.subr.mxu0 0.0
    %573 = vmatpush1.msra.mxu0 %v551
    %574 = vmatprep.subr.mxu0 0.0
    %575 = vmatpush1.msra.mxu0 %v556
    %576 = vmatprep.subr.mxu0 0.0
    %577 = vmatpush1.msra.mxu0 0.0
    %578 = vmatprep.subr.mxu0 0.0
    %579 = vmatpush1.msra.mxu0 0.0
    %580 = vmatprep.subr.mxu0 0.0
    %581 = vmatpush1.msra.mxu0 0.0
    %582 = vmatprep.subr.mxu0 0.0
    %583 = vmatpush1.msra.mxu0 0.0
    %584 = vmatprep.subr.mxu0 0.0
    %585 = vmatpush1.msra.mxu0 0.0
    %586 = vmatprep.subr.mxu0 0.0
    %587 = vmatpush1.msra.mxu0 0.0
    %588 = vmatprep.subr.mxu0 0.0
    %589 = vmatpush1.msra.mxu0 0.0
    %590 = vmatprep.subr.mxu0 0.0
    %591 = vmatpush1.msra.mxu0 0.0
    %592 = vmatprep.subr.mxu0 0.0
    %593 = vmatpush1.msra.mxu0 0.0
    %594 = vmatprep.subr.mxu0 0.0
    %595 = vmatpush1.msra.mxu0 0.0
    %596 = vmatprep.subr.mxu0 0.0
    %597 = vmatpush1.msra.mxu0 0.0
    %598 = vmatprep.subr.mxu0 0.0
    %599 = vmatpush1.msra.mxu0 0.0
    %600 = vmatprep.subr.mxu0 0.0
    %601 = vmatpush1.msra.mxu0 0.0
    %602 = vmatprep.subr.mxu0 0.0
    %603 = vmatpush1.msra.mxu0 0.0
    %604 = vmatprep.subr.mxu0 0.0
    %605 = vmatpush1.msra.mxu0 0.0
    %606 = vmatprep.subr.mxu0 0.0
    %607 = vmatpush1.msra.mxu0 0.0
    %608 = vmatprep.subr.mxu0 0.0
    %609 = vmatpush1.msra.mxu0 0.0
    %610 = vmatprep.subr.mxu0 0.0
    %611 = vmatpush1.msra.mxu0 0.0
    %612 = vmatprep.subr.mxu0 0.0
    %613 = vmatpush1.msra.mxu0 0.0
    %614 = vmatprep.subr.mxu0 0.0
    %615 = vmatpush1.msra.mxu0 0.0
    %616 = vmatprep.subr.mxu0 0.0
    %617 = vmatpush1.msra.mxu0 0.0
    %618 = vmatprep.subr.mxu0 0.0
    %619 = vmatpush1.msra.mxu0 0.0
    %620 = vmatprep.subr.mxu0 0.0
    %621 = vmatpush1.msra.mxu0 0.0
    %622 = vmatprep.subr.mxu0 0.0
    %623 = vmatpush1.msra.mxu0 0.0
    %624 = vmatprep.subr.mxu0 0.0
    %625 = vmatpush1.msra.mxu0 0.0
    %626 = vmatprep.subr.mxu0 0.0
    %627 = vmatpush1.msra.mxu0 0.0
    %628 = vmatprep.subr.mxu0 0.0
    %629 = vmatpush1.msra.mxu0 0.0
    %630 = vmatprep.subr.mxu0 0.0
    %631 = vmatpush1.msra.mxu0 0.0
    %632 = vmatprep.mubr.f32.mxu0 0.0
    %633 = vmatmul.mubr.f32.gmra.mrb[0].mxu0 %v563
    %v634 = vpop.f32.mrb[0].mxu0
    %v635 = vadd.f32 0.0, %v634
    %v636 = vpop.f32.mrb[0].mxu0
    %637 = vmatprep.mubr.f32.mxu0 0.0
    %638 = vmatmul.mubr.f32.gmra.mrb[0].mxu0 %v566
    %v639 = vpop.f32.mrb[0].mxu0
    %v640 = vadd.f32 0.0, %v639
    %v641 = vpop.f32.mrb[0].mxu0
    %642 = vdwg.mxu0
    %v643 = vadd.f32 %v461, %v635
    %v644 = vadd.f32 %v466, %v640
    %v645 = vld [vmem:[%s2] sm:$0xff]
    %v646 = vld [vmem:[%s2 + $0x8] sm:$0xff]
    %648 = vset.pattern.permute.xlu0 0
    %649 = vperm.xlu0 %648, %v645
    %v650 = vpop.permute.xlu0 %649
    %653 = vset.pattern.permute.xlu0 0
    %654 = vperm.xlu0 %653, %v646
    %v655 = vpop.permute.xlu0 %654
    %v657 = vadd.f32 %v643, %v650
    %v658 = vadd.f32 %v644, %v655
    %v659 = vmax.f32 %v657, 0.0
    %v660 = vmax.f32 %v658, 0.0
    %v661 = vld [vmem:[#allocation6] sm:$0xff]
    %v662 = vld [vmem:[#allocation6 + $0x8] sm:$0xff]
    %v663 = vld [vmem:[#allocation6 + $0x10] sm:$0xff]
    %v664 = vld [vmem:[#allocation6 + $0x18] sm:$0xff]
    %v666 = vsel %vm114, %v659, 0
    %v669 = vsel %vm114, %v660, 0
    %671 = vmatprep.subr.mxu0 0.0
    %672 = vmatpush1.msra.mxu0 %v661
    %673 = vmatprep.subr.mxu0 0.0
    %674 = vmatpush1.msra.mxu0 %v662
    %675 = vmatprep.subr.mxu0 0.0
    %676 = vmatpush1.msra.mxu0 %v663
    %677 = vmatprep.subr.mxu0 0.0
    %678 = vmatpush1.msra.mxu0 %v664
    %679 = vmatprep.subr.mxu0 0.0
    %680 = vmatpush1.msra.mxu0 0.0
    %681 = vmatprep.subr.mxu0 0.0
    %682 = vmatpush1.msra.mxu0 0.0
    %683 = vmatprep.subr.mxu0 0.0
    %684 = vmatpush1.msra.mxu0 0.0
    %685 = vmatprep.subr.mxu0 0.0
    %686 = vmatpush1.msra.mxu0 0.0
    %687 = vmatprep.subr.mxu0 0.0
    %688 = vmatpush1.msra.mxu0 0.0
    %689 = vmatprep.subr.mxu0 0.0
    %690 = vmatpush1.msra.mxu0 0.0
    %691 = vmatprep.subr.mxu0 0.0
    %692 = vmatpush1.msra.mxu0 0.0
    %693 = vmatprep.subr.mxu0 0.0
    %694 = vmatpush1.msra.mxu0 0.0
    %695 = vmatprep.subr.mxu0 0.0
    %696 = vmatpush1.msra.mxu0 0.0
    %697 = vmatprep.subr.mxu0 0.0
    %698 = vmatpush1.msra.mxu0 0.0
    %699 = vmatprep.subr.mxu0 0.0
    %700 = vmatpush1.msra.mxu0 0.0
    %701 = vmatprep.subr.mxu0 0.0
    %702 = vmatpush1.msra.mxu0 0.0
    %703 = vmatprep.subr.mxu0 0.0
    %704 = vmatpush1.msra.mxu0 0.0
    %705 = vmatprep.subr.mxu0 0.0
    %706 = vmatpush1.msra.mxu0 0.0
    %707 = vmatprep.subr.mxu0 0.0
    %708 = vmatpush1.msra.mxu0 0.0
    %709 = vmatprep.subr.mxu0 0.0
    %710 = vmatpush1.msra.mxu0 0.0
    %711 = vmatprep.subr.mxu0 0.0
    %712 = vmatpush1.msra.mxu0 0.0
    %713 = vmatprep.subr.mxu0 0.0
    %714 = vmatpush1.msra.mxu0 0.0
    %715 = vmatprep.subr.mxu0 0.0
    %716 = vmatpush1.msra.mxu0 0.0
    %717 = vmatprep.subr.mxu0 0.0
    %718 = vmatpush1.msra.mxu0 0.0
    %719 = vmatprep.subr.mxu0 0.0
    %720 = vmatpush1.msra.mxu0 0.0
    %721 = vmatprep.subr.mxu0 0.0
    %722 = vmatpush1.msra.mxu0 0.0
    %723 = vmatprep.subr.mxu0 0.0
    %724 = vmatpush1.msra.mxu0 0.0
    %725 = vmatprep.subr.mxu0 0.0
    %726 = vmatpush1.msra.mxu0 0.0
    %727 = vmatprep.subr.mxu0 0.0
    %728 = vmatpush1.msra.mxu0 0.0
    %729 = vmatprep.subr.mxu0 0.0
    %730 = vmatpush1.msra.mxu0 0.0
    %731 = vmatprep.subr.mxu0 0.0
    %732 = vmatpush1.msra.mxu0 0.0
    %733 = vmatprep.subr.mxu0 0.0
    %734 = vmatpush1.msra.mxu0 0.0
    %735 = vmatprep.mubr.f32.mxu0 0.0
    %736 = vmatmul.mubr.f32.gmra.mrb[0].mxu0 %v666
    %v737 = vpop.f32.mrb[0].mxu0
    %v738 = vadd.f32 0.0, %v737
    %v739 = vpop.f32.mrb[0].mxu0
    %740 = vmatprep.mubr.f32.mxu0 0.0
    %741 = vmatmul.mubr.f32.gmra.mrb[0].mxu0 %v669
    %v742 = vpop.f32.mrb[0].mxu0
    %v743 = vadd.f32 0.0, %v742
    %v744 = vpop.f32.mrb[0].mxu0
    %745 = vdwg.mxu0
    %v746 = vld [vmem:[%s4] sm:$0xff]
    %s747 = scalar_lea.vmem [#allocation6], 32
    %v748 = vld [vmem:[%s747] sm:$0xff]
    %v749 = vld [vmem:[%s747 + $0x8] sm:$0xff]
    %v750 = vld [vmem:[%s747 + $0x10] sm:$0xff]
    %v751 = vld [vmem:[%s747 + $0x18] sm:$0xff]
    %752 = vmatprep.subr.mxu0 0.0
    %753 = vmatpush1.msra.mxu0 %v748
    %754 = vmatprep.subr.mxu0 0.0
    %755 = vmatpush1.msra.mxu0 %v749
    %756 = vmatprep.subr.mxu0 0.0
    %757 = vmatpush1.msra.mxu0 %v750
    %758 = vmatprep.subr.mxu0 0.0
    %759 = vmatpush1.msra.mxu0 %v751
    %760 = vmatprep.subr.mxu0 0.0
    %761 = vmatpush1.msra.mxu0 0.0
    %762 = vmatprep.subr.mxu0 0.0
    %763 = vmatpush1.msra.mxu0 0.0
    %764 = vmatprep.subr.mxu0 0.0
    %765 = vmatpush1.msra.mxu0 0.0
    %766 = vmatprep.subr.mxu0 0.0
    %767 = vmatpush1.msra.mxu0 0.0
    %768 = vmatprep.subr.mxu0 0.0
    %769 = vmatpush1.msra.mxu0 0.0
    %770 = vmatprep.subr.mxu0 0.0
    %771 = vmatpush1.msra.mxu0 0.0
    %772 = vmatprep.subr.mxu0 0.0
    %773 = vmatpush1.msra.mxu0 0.0
    %774 = vmatprep.subr.mxu0 0.0
    %775 = vmatpush1.msra.mxu0 0.0
    %776 = vmatprep.subr.mxu0 0.0
    %777 = vmatpush1.msra.mxu0 0.0
    %778 = vmatprep.subr.mxu0 0.0
    %779 = vmatpush1.msra.mxu0 0.0
    %780 = vmatprep.subr.mxu0 0.0
    %781 = vmatpush1.msra.mxu0 0.0
    %782 = vmatprep.subr.mxu0 0.0
    %783 = vmatpush1.msra.mxu0 0.0
    %784 = vmatprep.subr.mxu0 0.0
    %785 = vmatpush1.msra.mxu0 0.0
    %786 = vmatprep.subr.mxu0 0.0
    %787 = vmatpush1.msra.mxu0 0.0
    %788 = vmatprep.subr.mxu0 0.0
    %789 = vmatpush1.msra.mxu0 0.0
    %790 = vmatprep.subr.mxu0 0.0
    %791 = vmatpush1.msra.mxu0 0.0
    %792 = vmatprep.subr.mxu0 0.0
    %793 = vmatpush1.msra.mxu0 0.0
    %794 = vmatprep.subr.mxu0 0.0
    %795 = vmatpush1.msra.mxu0 0.0
    %796 = vmatprep.subr.mxu0 0.0
    %797 = vmatpush1.msra.mxu0 0.0
    %798 = vmatprep.subr.mxu0 0.0
    %799 = vmatpush1.msra.mxu0 0.0
    %800 = vmatprep.subr.mxu0 0.0
    %801 = vmatpush1.msra.mxu0 0.0
    %802 = vmatprep.subr.mxu0 0.0
    %803 = vmatpush1.msra.mxu0 0.0
    %804 = vmatprep.subr.mxu0 0.0
    %805 = vmatpush1.msra.mxu0 0.0
    %806 = vmatprep.subr.mxu0 0.0
    %807 = vmatpush1.msra.mxu0 0.0
    %808 = vmatprep.subr.mxu0 0.0
    %809 = vmatpush1.msra.mxu0 0.0
    %810 = vmatprep.subr.mxu0 0.0
    %811 = vmatpush1.msra.mxu0 0.0
    %812 = vmatprep.subr.mxu0 0.0
    %813 = vmatpush1.msra.mxu0 0.0
    %814 = vmatprep.subr.mxu0 0.0
    %815 = vmatpush1.msra.mxu0 0.0
    %816 = vmatprep.mubr.f32.mxu0 0.0
    %817 = vmatmul.mubr.f32.gmra.mrb[0].mxu0 %v666
    %v818 = vpop.f32.mrb[0].mxu0
    %v819 = vadd.f32 0.0, %v818
    %v820 = vpop.f32.mrb[0].mxu0
    %821 = vmatprep.mubr.f32.mxu0 0.0
    %822 = vmatmul.mubr.f32.gmra.mrb[0].mxu0 %v669
    %v823 = vpop.f32.mrb[0].mxu0
    %v824 = vadd.f32 0.0, %v823
    %v825 = vpop.f32.mrb[0].mxu0
    %826 = vdwg.mxu0
    %s827 = scalar_lea.vmem %s4, 8
    %v828 = vld [vmem:[%s827] sm:$0xff]
    %vm829 = vcmask 130048
    %v831 = vsel %vm829, %v828, 0
    %833 = vmatprep.subr.mxu0 0.0
    %834 = vmatpush1.msra.mxu0 %v819
    %835 = vmatprep.subr.mxu0 0.0
    %836 = vmatpush1.msra.mxu0 %v824
    %837 = vmatprep.subr.mxu0 0.0
    %838 = vmatpush1.msra.mxu0 0.0
    %839 = vmatprep.subr.mxu0 0.0
    %840 = vmatpush1.msra.mxu0 0.0
    %841 = vmatprep.subr.mxu0 0.0
    %842 = vmatpush1.msra.mxu0 0.0
    %843 = vmatprep.subr.mxu0 0.0
    %844 = vmatpush1.msra.mxu0 0.0
    %845 = vmatprep.subr.mxu0 0.0
    %846 = vmatpush1.msra.mxu0 0.0
    %847 = vmatprep.subr.mxu0 0.0
    %848 = vmatpush1.msra.mxu0 0.0
    %849 = vmatprep.subr.mxu0 0.0
    %850 = vmatpush1.msra.mxu0 0.0
    %851 = vmatprep.subr.mxu0 0.0
    %852 = vmatpush1.msra.mxu0 0.0
    %853 = vmatprep.subr.mxu0 0.0
    %854 = vmatpush1.msra.mxu0 0.0
    %855 = vmatprep.subr.mxu0 0.0
    %856 = vmatpush1.msra.mxu0 0.0
    %857 = vmatprep.subr.mxu0 0.0
    %858 = vmatpush1.msra.mxu0 0.0
    %859 = vmatprep.subr.mxu0 0.0
    %860 = vmatpush1.msra.mxu0 0.0
    %861 = vmatprep.subr.mxu0 0.0
    %862 = vmatpush1.msra.mxu0 0.0
    %863 = vmatprep.subr.mxu0 0.0
    %864 = vmatpush1.msra.mxu0 0.0
    %865 = vmatprep.subr.mxu0 0.0
    %866 = vmatpush1.msra.mxu0 0.0
    %867 = vmatprep.subr.mxu0 0.0
    %868 = vmatpush1.msra.mxu0 0.0
    %869 = vmatprep.subr.mxu0 0.0
    %870 = vmatpush1.msra.mxu0 0.0
    %871 = vmatprep.subr.mxu0 0.0
    %872 = vmatpush1.msra.mxu0 0.0
    %873 = vmatprep.subr.mxu0 0.0
    %874 = vmatpush1.msra.mxu0 0.0
    %875 = vmatprep.subr.mxu0 0.0
    %876 = vmatpush1.msra.mxu0 0.0
    %877 = vmatprep.subr.mxu0 0.0
    %878 = vmatpush1.msra.mxu0 0.0
    %879 = vmatprep.subr.mxu0 0.0
    %880 = vmatpush1.msra.mxu0 0.0
    %881 = vmatprep.subr.mxu0 0.0
    %882 = vmatpush1.msra.mxu0 0.0
    %883 = vmatprep.subr.mxu0 0.0
    %884 = vmatpush1.msra.mxu0 0.0
    %885 = vmatprep.subr.mxu0 0.0
    %886 = vmatpush1.msra.mxu0 0.0
    %887 = vmatprep.subr.mxu0 0.0
    %888 = vmatpush1.msra.mxu0 0.0
    %889 = vmatprep.subr.mxu0 0.0
    %890 = vmatpush1.msra.mxu0 0.0
    %891 = vmatprep.subr.mxu0 0.0
    %892 = vmatpush1.msra.mxu0 0.0
    %893 = vmatprep.subr.mxu0 0.0
    %894 = vmatpush1.msra.mxu0 0.0
    %895 = vmatprep.subr.mxu0 0.0
    %896 = vmatpush1.msra.mxu0 0.0
    %897 = vmatprep.mubr.f32.mxu0 0.0
    %898 = vmatmul.mubr.f32.gmra.mrb[0].mxu0 %v831
    %v899 = vpop.f32.mrb[0].mxu0
    %v900 = vadd.f32 0.0, %v899
    %v901 = vpop.f32.mrb[0].mxu0
    %902 = vdwg.mxu0
    %v904 = vsel %vm829, %v746, 0
    %906 = vmatprep.subr.mxu0 0.0
    %907 = vmatpush1.msra.mxu0 %v738
    %908 = vmatprep.subr.mxu0 0.0
    %909 = vmatpush1.msra.mxu0 %v743
    %910 = vmatprep.subr.mxu0 0.0
    %911 = vmatpush1.msra.mxu0 0.0
    %912 = vmatprep.subr.mxu0 0.0
    %913 = vmatpush1.msra.mxu0 0.0
    %914 = vmatprep.subr.mxu0 0.0
    %915 = vmatpush1.msra.mxu0 0.0
    %916 = vmatprep.subr.mxu0 0.0
    %917 = vmatpush1.msra.mxu0 0.0
    %918 = vmatprep.subr.mxu0 0.0
    %919 = vmatpush1.msra.mxu0 0.0
    %920 = vmatprep.subr.mxu0 0.0
    %921 = vmatpush1.msra.mxu0 0.0
    %922 = vmatprep.subr.mxu0 0.0
    %923 = vmatpush1.msra.mxu0 0.0
    %924 = vmatprep.subr.mxu0 0.0
    %925 = vmatpush1.msra.mxu0 0.0
    %926 = vmatprep.subr.mxu0 0.0
    %927 = vmatpush1.msra.mxu0 0.0
    %928 = vmatprep.subr.mxu0 0.0
    %929 = vmatpush1.msra.mxu0 0.0
    %930 = vmatprep.subr.mxu0 0.0
    %931 = vmatpush1.msra.mxu0 0.0
    %932 = vmatprep.subr.mxu0 0.0
    %933 = vmatpush1.msra.mxu0 0.0
    %934 = vmatprep.subr.mxu0 0.0
    %935 = vmatpush1.msra.mxu0 0.0
    %936 = vmatprep.subr.mxu0 0.0
    %937 = vmatpush1.msra.mxu0 0.0
    %938 = vmatprep.subr.mxu0 0.0
    %939 = vmatpush1.msra.mxu0 0.0
    %940 = vmatprep.subr.mxu0 0.0
    %941 = vmatpush1.msra.mxu0 0.0
    %942 = vmatprep.subr.mxu0 0.0
    %943 = vmatpush1.msra.mxu0 0.0
    %944 = vmatprep.subr.mxu0 0.0
    %945 = vmatpush1.msra.mxu0 0.0
    %946 = vmatprep.subr.mxu0 0.0
    %947 = vmatpush1.msra.mxu0 0.0
    %948 = vmatprep.subr.mxu0 0.0
    %949 = vmatpush1.msra.mxu0 0.0
    %950 = vmatprep.subr.mxu0 0.0
    %951 = vmatpush1.msra.mxu0 0.0
    %952 = vmatprep.subr.mxu0 0.0
    %953 = vmatpush1.msra.mxu0 0.0
    %954 = vmatprep.subr.mxu0 0.0
    %955 = vmatpush1.msra.mxu0 0.0
    %956 = vmatprep.subr.mxu0 0.0
    %957 = vmatpush1.msra.mxu0 0.0
    %958 = vmatprep.subr.mxu0 0.0
    %959 = vmatpush1.msra.mxu0 0.0
    %960 = vmatprep.subr.mxu0 0.0
    %961 = vmatpush1.msra.mxu0 0.0
    %962 = vmatprep.subr.mxu0 0.0
    %963 = vmatpush1.msra.mxu0 0.0
    %964 = vmatprep.subr.mxu0 0.0
    %965 = vmatpush1.msra.mxu0 0.0
    %966 = vmatprep.subr.mxu0 0.0
    %967 = vmatpush1.msra.mxu0 0.0
    %968 = vmatprep.subr.mxu0 0.0
    %969 = vmatpush1.msra.mxu0 0.0
    %970 = vmatprep.mubr.f32.mxu0 0.0
    %971 = vmatmul.mubr.f32.gmra.mrb[0].mxu0 %v904
    %v972 = vpop.f32.mrb[0].mxu0
    %v973 = vadd.f32 %v900, %v972
    %v974 = vpop.f32.mrb[0].mxu0
    %975 = vdwg.mxu0
    %s976 = scalar_lea.vmem [#allocation6], 64
    %v977 = vld [vmem:[%s976] sm:$0xff]
    %v978 = vld [vmem:[%s976 + $0x8] sm:$0xff]
    %v979 = vld [vmem:[%s976 + $0x10] sm:$0xff]
    %v980 = vld [vmem:[%s976 + $0x18] sm:$0xff]
    %981 = vmatprep.subr.mxu0 0.0
    %982 = vmatpush1.msra.mxu0 %v977
    %983 = vmatprep.subr.mxu0 0.0
    %984 = vmatpush1.msra.mxu0 %v978
    %985 = vmatprep.subr.mxu0 0.0
    %986 = vmatpush1.msra.mxu0 %v979
    %987 = vmatprep.subr.mxu0 0.0
    %988 = vmatpush1.msra.mxu0 %v980
    %989 = vmatprep.subr.mxu0 0.0
    %990 = vmatpush1.msra.mxu0 0.0
    %991 = vmatprep.subr.mxu0 0.0
    %992 = vmatpush1.msra.mxu0 0.0
    %993 = vmatprep.subr.mxu0 0.0
    %994 = vmatpush1.msra.mxu0 0.0
    %995 = vmatprep.subr.mxu0 0.0
    %996 = vmatpush1.msra.mxu0 0.0
    %997 = vmatprep.subr.mxu0 0.0
    %998 = vmatpush1.msra.mxu0 0.0
    %999 = vmatprep.subr.mxu0 0.0
    %1000 = vmatpush1.msra.mxu0 0.0
    %1001 = vmatprep.subr.mxu0 0.0
    %1002 = vmatpush1.msra.mxu0 0.0
    %1003 = vmatprep.subr.mxu0 0.0
    %1004 = vmatpush1.msra.mxu0 0.0
    %1005 = vmatprep.subr.mxu0 0.0
    %1006 = vmatpush1.msra.mxu0 0.0
    %1007 = vmatprep.subr.mxu0 0.0
    %1008 = vmatpush1.msra.mxu0 0.0
    %1009 = vmatprep.subr.mxu0 0.0
    %1010 = vmatpush1.msra.mxu0 0.0
    %1011 = vmatprep.subr.mxu0 0.0
    %1012 = vmatpush1.msra.mxu0 0.0
    %1013 = vmatprep.subr.mxu0 0.0
    %1014 = vmatpush1.msra.mxu0 0.0
    %1015 = vmatprep.subr.mxu0 0.0
    %1016 = vmatpush1.msra.mxu0 0.0
    %1017 = vmatprep.subr.mxu0 0.0
    %1018 = vmatpush1.msra.mxu0 0.0
    %1019 = vmatprep.subr.mxu0 0.0
    %1020 = vmatpush1.msra.mxu0 0.0
    %1021 = vmatprep.subr.mxu0 0.0
    %1022 = vmatpush1.msra.mxu0 0.0
    %1023 = vmatprep.subr.mxu0 0.0
    %1024 = vmatpush1.msra.mxu0 0.0
    %1025 = vmatprep.subr.mxu0 0.0
    %1026 = vmatpush1.msra.mxu0 0.0
    %1027 = vmatprep.subr.mxu0 0.0
    %1028 = vmatpush1.msra.mxu0 0.0
    %1029 = vmatprep.subr.mxu0 0.0
    %1030 = vmatpush1.msra.mxu0 0.0
    %1031 = vmatprep.subr.mxu0 0.0
    %1032 = vmatpush1.msra.mxu0 0.0
    %1033 = vmatprep.subr.mxu0 0.0
    %1034 = vmatpush1.msra.mxu0 0.0
    %1035 = vmatprep.subr.mxu0 0.0
    %1036 = vmatpush1.msra.mxu0 0.0
    %1037 = vmatprep.subr.mxu0 0.0
    %1038 = vmatpush1.msra.mxu0 0.0
    %1039 = vmatprep.subr.mxu0 0.0
    %1040 = vmatpush1.msra.mxu0 0.0
    %1041 = vmatprep.subr.mxu0 0.0
    %1042 = vmatpush1.msra.mxu0 0.0
    %1043 = vmatprep.subr.mxu0 0.0
    %1044 = vmatpush1.msra.mxu0 0.0
    %1045 = vmatprep.mubr.f32.mxu0 0.0
    %1046 = vmatmul.mubr.f32.gmra.mrb[0].mxu0 %v666
    %v1047 = vpop.f32.mrb[0].mxu0
    %v1048 = vadd.f32 0.0, %v1047
    %v1049 = vpop.f32.mrb[0].mxu0
    %1050 = vmatprep.mubr.f32.mxu0 0.0
    %1051 = vmatmul.mubr.f32.gmra.mrb[0].mxu0 %v669
    %v1052 = vpop.f32.mrb[0].mxu0
    %v1053 = vadd.f32 0.0, %v1052
    %v1054 = vpop.f32.mrb[0].mxu0
    %1055 = vdwg.mxu0
    %s1056 = scalar_lea.vmem %s4, 16
    %v1057 = vld [vmem:[%s1056] sm:$0xff]
    %v1059 = vsel %vm829, %v1057, 0
    %1061 = vmatprep.subr.mxu0 0.0
    %1062 = vmatpush1.msra.mxu0 %v1048
    %1063 = vmatprep.subr.mxu0 0.0
    %1064 = vmatpush1.msra.mxu0 %v1053
    %1065 = vmatprep.subr.mxu0 0.0
    %1066 = vmatpush1.msra.mxu0 0.0
    %1067 = vmatprep.subr.mxu0 0.0
    %1068 = vmatpush1.msra.mxu0 0.0
    %1069 = vmatprep.subr.mxu0 0.0
    %1070 = vmatpush1.msra.mxu0 0.0
    %1071 = vmatprep.subr.mxu0 0.0
    %1072 = vmatpush1.msra.mxu0 0.0
    %1073 = vmatprep.subr.mxu0 0.0
    %1074 = vmatpush1.msra.mxu0 0.0
    %1075 = vmatprep.subr.mxu0 0.0
    %1076 = vmatpush1.msra.mxu0 0.0
    %1077 = vmatprep.subr.mxu0 0.0
    %1078 = vmatpush1.msra.mxu0 0.0
    %1079 = vmatprep.subr.mxu0 0.0
    %1080 = vmatpush1.msra.mxu0 0.0
    %1081 = vmatprep.subr.mxu0 0.0
    %1082 = vmatpush1.msra.mxu0 0.0
    %1083 = vmatprep.subr.mxu0 0.0
    %1084 = vmatpush1.msra.mxu0 0.0
    %1085 = vmatprep.subr.mxu0 0.0
    %1086 = vmatpush1.msra.mxu0 0.0
    %1087 = vmatprep.subr.mxu0 0.0
    %1088 = vmatpush1.msra.mxu0 0.0
    %1089 = vmatprep.subr.mxu0 0.0
    %1090 = vmatpush1.msra.mxu0 0.0
    %1091 = vmatprep.subr.mxu0 0.0
    %1092 = vmatpush1.msra.mxu0 0.0
    %1093 = vmatprep.subr.mxu0 0.0
    %1094 = vmatpush1.msra.mxu0 0.0
    %1095 = vmatprep.subr.mxu0 0.0
    %1096 = vmatpush1.msra.mxu0 0.0
    %1097 = vmatprep.subr.mxu0 0.0
    %1098 = vmatpush1.msra.mxu0 0.0
    %1099 = vmatprep.subr.mxu0 0.0
    %1100 = vmatpush1.msra.mxu0 0.0
    %1101 = vmatprep.subr.mxu0 0.0
    %1102 = vmatpush1.msra.mxu0 0.0
    %1103 = vmatprep.subr.mxu0 0.0
    %1104 = vmatpush1.msra.mxu0 0.0
    %1105 = vmatprep.subr.mxu0 0.0
    %1106 = vmatpush1.msra.mxu0 0.0
    %1107 = vmatprep.subr.mxu0 0.0
    %1108 = vmatpush1.msra.mxu0 0.0
    %1109 = vmatprep.subr.mxu0 0.0
    %1110 = vmatpush1.msra.mxu0 0.0
    %1111 = vmatprep.subr.mxu0 0.0
    %1112 = vmatpush1.msra.mxu0 0.0
    %1113 = vmatprep.subr.mxu0 0.0
    %1114 = vmatpush1.msra.mxu0 0.0
    %1115 = vmatprep.subr.mxu0 0.0
    %1116 = vmatpush1.msra.mxu0 0.0
    %1117 = vmatprep.subr.mxu0 0.0
    %1118 = vmatpush1.msra.mxu0 0.0
    %1119 = vmatprep.subr.mxu0 0.0
    %1120 = vmatpush1.msra.mxu0 0.0
    %1121 = vmatprep.subr.mxu0 0.0
    %1122 = vmatpush1.msra.mxu0 0.0
    %1123 = vmatprep.subr.mxu0 0.0
    %1124 = vmatpush1.msra.mxu0 0.0
    %1125 = vmatprep.mubr.f32.mxu0 0.0
    %1126 = vmatmul.mubr.f32.gmra.mrb[0].mxu0 %v1059
    %v1127 = vpop.f32.mrb[0].mxu0
    %v1128 = vadd.f32 0.0, %v1127
    %v1129 = vpop.f32.mrb[0].mxu0
    %1130 = vdwg.mxu0
    %v1131 = vadd.f32 %v973, %v1128
    %v1132 = vld [vmem:[%s5] sm:$0xff]
    %1134 = vset.pattern.permute.xlu0 0
    %1135 = vperm.xlu0 %1134, %v1132
    %v1136 = vpop.permute.xlu0 %1135
    %v1138 = vadd.f32 %v1131, %v1136
    %v1139 = vmax.f32 %v1138, 0.0
    %v1140 = vld [vmem:[%s9] sm:$0xff]
    %v1141 = vld [vmem:[%s9 + $0x8] sm:$0xff]
    %v1142 = vld [vmem:[%s9 + $0x10] sm:$0xff]
    %v1143 = vld [vmem:[%s9 + $0x18] sm:$0xff]
    %v1144 = vld [vmem:[%s9 + $0x20] sm:$0xff]
    %v1145 = vld [vmem:[%s9 + $0x28] sm:$0xff]
    %v1146 = vld [vmem:[%s9 + $0x30] sm:$0xff]
    %vm1147 = vcmask 457728
    %v1149 = vsel %vm1147, %v1139, 0
    %1151 = vmatprep.subr.mxu0 0.0
    %1152 = vmatpush1.msra.mxu0 %v1140
    %1153 = vmatprep.subr.mxu0 0.0
    %1154 = vmatpush1.msra.mxu0 %v1141
    %1155 = vmatprep.subr.mxu0 0.0
    %1156 = vmatpush1.msra.mxu0 %v1142
    %1157 = vmatprep.subr.mxu0 0.0
    %1158 = vmatpush1.msra.mxu0 %v1143
    %1159 = vmatprep.subr.mxu0 0.0
    %1160 = vmatpush1.msra.mxu0 %v1144
    %1161 = vmatprep.subr.mxu0 0.0
    %1162 = vmatpush1.msra.mxu0 %v1145
    %1163 = vmatprep.subr.mxu0 0.0
    %1164 = vmatpush1.msra.mxu0 %v1146
    %1165 = vmatprep.subr.mxu0 0.0
    %1166 = vmatpush1.msra.mxu0 0.0
    %1167 = vmatprep.subr.mxu0 0.0
    %1168 = vmatpush1.msra.mxu0 0.0
    %1169 = vmatprep.subr.mxu0 0.0
    %1170 = vmatpush1.msra.mxu0 0.0
    %1171 = vmatprep.subr.mxu0 0.0
    %1172 = vmatpush1.msra.mxu0 0.0
    %1173 = vmatprep.subr.mxu0 0.0
    %1174 = vmatpush1.msra.mxu0 0.0
    %1175 = vmatprep.subr.mxu0 0.0
    %1176 = vmatpush1.msra.mxu0 0.0
    %1177 = vmatprep.subr.mxu0 0.0
    %1178 = vmatpush1.msra.mxu0 0.0
    %1179 = vmatprep.subr.mxu0 0.0
    %1180 = vmatpush1.msra.mxu0 0.0
    %1181 = vmatprep.subr.mxu0 0.0
    %1182 = vmatpush1.msra.mxu0 0.0
    %1183 = vmatprep.subr.mxu0 0.0
    %1184 = vmatpush1.msra.mxu0 0.0
    %1185 = vmatprep.subr.mxu0 0.0
    %1186 = vmatpush1.msra.mxu0 0.0
    %1187 = vmatprep.subr.mxu0 0.0
    %1188 = vmatpush1.msra.mxu0 0.0
    %1189 = vmatprep.subr.mxu0 0.0
    %1190 = vmatpush1.msra.mxu0 0.0
    %1191 = vmatprep.subr.mxu0 0.0
    %1192 = vmatpush1.msra.mxu0 0.0
    %1193 = vmatprep.subr.mxu0 0.0
    %1194 = vmatpush1.msra.mxu0 0.0
    %1195 = vmatprep.subr.mxu0 0.0
    %1196 = vmatpush1.msra.mxu0 0.0
    %1197 = vmatprep.subr.mxu0 0.0
    %1198 = vmatpush1.msra.mxu0 0.0
    %1199 = vmatprep.subr.mxu0 0.0
    %1200 = vmatpush1.msra.mxu0 0.0
    %1201 = vmatprep.subr.mxu0 0.0
    %1202 = vmatpush1.msra.mxu0 0.0
    %1203 = vmatprep.subr.mxu0 0.0
    %1204 = vmatpush1.msra.mxu0 0.0
    %1205 = vmatprep.subr.mxu0 0.0
    %1206 = vmatpush1.msra.mxu0 0.0
    %1207 = vmatprep.subr.mxu0 0.0
    %1208 = vmatpush1.msra.mxu0 0.0
    %1209 = vmatprep.subr.mxu0 0.0
    %1210 = vmatpush1.msra.mxu0 0.0
    %1211 = vmatprep.subr.mxu0 0.0
    %1212 = vmatpush1.msra.mxu0 0.0
    %1213 = vmatprep.subr.mxu0 0.0
    %1214 = vmatpush1.msra.mxu0 0.0
    %1215 = vmatprep.mubr.f32.mxu0 0.0
    %1216 = vmatmul.mubr.f32.gmra.mrb[0].mxu0 %v1149
    %v1217 = vpop.f32.mrb[0].mxu0
    %v1218 = vadd.f32 0.0, %v1217
    %v1219 = vpop.f32.mrb[0].mxu0
    %1220 = vdwg.mxu0
    %v1221 = vld [vmem:[#allocation7] sm:$0xf]
    %s1222 = scalar_lea.vmem %s9, 56
    %v1223 = vld [vmem:[%s1222] sm:$0xff]
    %v1224 = vld [vmem:[%s1222 + $0x8] sm:$0xff]
    %v1225 = vld [vmem:[%s1222 + $0x10] sm:$0xff]
    %v1226 = vld [vmem:[%s1222 + $0x18] sm:$0xff]
    %v1227 = vld [vmem:[%s1222 + $0x20] sm:$0xff]
    %v1228 = vld [vmem:[%s1222 + $0x28] sm:$0xff]
    %v1229 = vld [vmem:[%s1222 + $0x30] sm:$0xff]
    %1230 = vmatprep.subr.mxu0 0.0
    %1231 = vmatpush1.msra.mxu0 %v1223
    %1232 = vmatprep.subr.mxu0 0.0
    %1233 = vmatpush1.msra.mxu0 %v1224
    %1234 = vmatprep.subr.mxu0 0.0
    %1235 = vmatpush1.msra.mxu0 %v1225
    %1236 = vmatprep.subr.mxu0 0.0
    %1237 = vmatpush1.msra.mxu0 %v1226
    %1238 = vmatprep.subr.mxu0 0.0
    %1239 = vmatpush1.msra.mxu0 %v1227
    %1240 = vmatprep.subr.mxu0 0.0
    %1241 = vmatpush1.msra.mxu0 %v1228
    %1242 = vmatprep.subr.mxu0 0.0
    %1243 = vmatpush1.msra.mxu0 %v1229
    %1244 = vmatprep.subr.mxu0 0.0
    %1245 = vmatpush1.msra.mxu0 0.0
    %1246 = vmatprep.subr.mxu0 0.0
    %1247 = vmatpush1.msra.mxu0 0.0
    %1248 = vmatprep.subr.mxu0 0.0
    %1249 = vmatpush1.msra.mxu0 0.0
    %1250 = vmatprep.subr.mxu0 0.0
    %1251 = vmatpush1.msra.mxu0 0.0
    %1252 = vmatprep.subr.mxu0 0.0
    %1253 = vmatpush1.msra.mxu0 0.0
    %1254 = vmatprep.subr.mxu0 0.0
    %1255 = vmatpush1.msra.mxu0 0.0
    %1256 = vmatprep.subr.mxu0 0.0
    %1257 = vmatpush1.msra.mxu0 0.0
    %1258 = vmatprep.subr.mxu0 0.0
    %1259 = vmatpush1.msra.mxu0 0.0
    %1260 = vmatprep.subr.mxu0 0.0
    %1261 = vmatpush1.msra.mxu0 0.0
    %1262 = vmatprep.subr.mxu0 0.0
    %1263 = vmatpush1.msra.mxu0 0.0
    %1264 = vmatprep.subr.mxu0 0.0
    %1265 = vmatpush1.msra.mxu0 0.0
    %1266 = vmatprep.subr.mxu0 0.0
    %1267 = vmatpush1.msra.mxu0 0.0
    %1268 = vmatprep.subr.mxu0 0.0
    %1269 = vmatpush1.msra.mxu0 0.0
    %1270 = vmatprep.subr.mxu0 0.0
    %1271 = vmatpush1.msra.mxu0 0.0
    %1272 = vmatprep.subr.mxu0 0.0
    %1273 = vmatpush1.msra.mxu0 0.0
    %1274 = vmatprep.subr.mxu0 0.0
    %1275 = vmatpush1.msra.mxu0 0.0
    %1276 = vmatprep.subr.mxu0 0.0
    %1277 = vmatpush1.msra.mxu0 0.0
    %1278 = vmatprep.subr.mxu0 0.0
    %1279 = vmatpush1.msra.mxu0 0.0
    %1280 = vmatprep.subr.mxu0 0.0
    %1281 = vmatpush1.msra.mxu0 0.0
    %1282 = vmatprep.subr.mxu0 0.0
    %1283 = vmatpush1.msra.mxu0 0.0
    %1284 = vmatprep.subr.mxu0 0.0
    %1285 = vmatpush1.msra.mxu0 0.0
    %1286 = vmatprep.subr.mxu0 0.0
    %1287 = vmatpush1.msra.mxu0 0.0
    %1288 = vmatprep.subr.mxu0 0.0
    %1289 = vmatpush1.msra.mxu0 0.0
    %1290 = vmatprep.subr.mxu0 0.0
    %1291 = vmatpush1.msra.mxu0 0.0
    %1292 = vmatprep.subr.mxu0 0.0
    %1293 = vmatpush1.msra.mxu0 0.0
    %1294 = vmatprep.mubr.f32.mxu0 0.0
    %1295 = vmatmul.mubr.f32.gmra.mrb[0].mxu0 %v1149
    %v1296 = vpop.f32.mrb[0].mxu0
    %v1297 = vadd.f32 0.0, %v1296
    %v1298 = vpop.f32.mrb[0].mxu0
    %1299 = vdwg.mxu0
    %s1300 = scalar_lea.vmem [#allocation7], 4
    %v1301 = vld [vmem:[%s1300] sm:$0xf]
    %vm1302 = vcmask 64512
    %v1304 = vsel %vm1302, %v1301, 0
    %1306 = vmatprep.subr.mxu0 0.0
    %1307 = vmatpush1.msra.mxu0 %v1297
    %1308 = vmatprep.subr.mxu0 0.0
    %1309 = vmatpush1.msra.mxu0 0.0
    %1310 = vmatprep.subr.mxu0 0.0
    %1311 = vmatpush1.msra.mxu0 0.0
    %1312 = vmatprep.subr.mxu0 0.0
    %1313 = vmatpush1.msra.mxu0 0.0
    %1314 = vmatprep.subr.mxu0 0.0
    %1315 = vmatpush1.msra.mxu0 0.0
    %1316 = vmatprep.subr.mxu0 0.0
    %1317 = vmatpush1.msra.mxu0 0.0
    %1318 = vmatprep.subr.mxu0 0.0
    %1319 = vmatpush1.msra.mxu0 0.0
    %1320 = vmatprep.subr.mxu0 0.0
    %1321 = vmatpush1.msra.mxu0 0.0
    %1322 = vmatprep.subr.mxu0 0.0
    %1323 = vmatpush1.msra.mxu0 0.0
    %1324 = vmatprep.subr.mxu0 0.0
    %1325 = vmatpush1.msra.mxu0 0.0
    %1326 = vmatprep.subr.mxu0 0.0
    %1327 = vmatpush1.msra.mxu0 0.0
    %1328 = vmatprep.subr.mxu0 0.0
    %1329 = vmatpush1.msra.mxu0 0.0
    %1330 = vmatprep.subr.mxu0 0.0
    %1331 = vmatpush1.msra.mxu0 0.0
    %1332 = vmatprep.subr.mxu0 0.0
    %1333 = vmatpush1.msra.mxu0 0.0
    %1334 = vmatprep.subr.mxu0 0.0
    %1335 = vmatpush1.msra.mxu0 0.0
    %1336 = vmatprep.subr.mxu0 0.0
    %1337 = vmatpush1.msra.mxu0 0.0
    %1338 = vmatprep.subr.mxu0 0.0
    %1339 = vmatpush1.msra.mxu0 0.0
    %1340 = vmatprep.subr.mxu0 0.0
    %1341 = vmatpush1.msra.mxu0 0.0
    %1342 = vmatprep.subr.mxu0 0.0
    %1343 = vmatpush1.msra.mxu0 0.0
    %1344 = vmatprep.subr.mxu0 0.0
    %1345 = vmatpush1.msra.mxu0 0.0
    %1346 = vmatprep.subr.mxu0 0.0
    %1347 = vmatpush1.msra.mxu0 0.0
    %1348 = vmatprep.subr.mxu0 0.0
    %1349 = vmatpush1.msra.mxu0 0.0
    %1350 = vmatprep.subr.mxu0 0.0
    %1351 = vmatpush1.msra.mxu0 0.0
    %1352 = vmatprep.subr.mxu0 0.0
    %1353 = vmatpush1.msra.mxu0 0.0
    %1354 = vmatprep.subr.mxu0 0.0
    %1355 = vmatpush1.msra.mxu0 0.0
    %1356 = vmatprep.subr.mxu0 0.0
    %1357 = vmatpush1.msra.mxu0 0.0
    %1358 = vmatprep.subr.mxu0 0.0
    %1359 = vmatpush1.msra.mxu0 0.0
    %1360 = vmatprep.subr.mxu0 0.0
    %1361 = vmatpush1.msra.mxu0 0.0
    %1362 = vmatprep.subr.mxu0 0.0
    %1363 = vmatpush1.msra.mxu0 0.0
    %1364 = vmatprep.subr.mxu0 0.0
    %1365 = vmatpush1.msra.mxu0 0.0
    %1366 = vmatprep.subr.mxu0 0.0
    %1367 = vmatpush1.msra.mxu0 0.0
    %1368 = vmatprep.subr.mxu0 0.0
    %1369 = vmatpush1.msra.mxu0 0.0
    %1370 = vmatprep.mubr.f32.mxu0 0.0
    %1371 = vmatmul.mubr.f32.gmra.mrb[0].mxu0 %v1304
    %v1372 = vpop.f32.mrb[0].mxu0
    %v1373 = vadd.f32 0.0, %v1372
    %v1374 = vpop.f32.mrb[0].mxu0
    %1375 = vdwg.mxu0
    %v1377 = vsel %vm1302, %v1221, 0
    %1379 = vmatprep.subr.mxu0 0.0
    %1380 = vmatpush1.msra.mxu0 %v1218
    %1381 = vmatprep.subr.mxu0 0.0
    %1382 = vmatpush1.msra.mxu0 0.0
    %1383 = vmatprep.subr.mxu0 0.0
    %1384 = vmatpush1.msra.mxu0 0.0
    %1385 = vmatprep.subr.mxu0 0.0
    %1386 = vmatpush1.msra.mxu0 0.0
    %1387 = vmatprep.subr.mxu0 0.0
    %1388 = vmatpush1.msra.mxu0 0.0
    %1389 = vmatprep.subr.mxu0 0.0
    %1390 = vmatpush1.msra.mxu0 0.0
    %1391 = vmatprep.subr.mxu0 0.0
    %1392 = vmatpush1.msra.mxu0 0.0
    %1393 = vmatprep.subr.mxu0 0.0
    %1394 = vmatpush1.msra.mxu0 0.0
    %1395 = vmatprep.subr.mxu0 0.0
    %1396 = vmatpush1.msra.mxu0 0.0
    %1397 = vmatprep.subr.mxu0 0.0
    %1398 = vmatpush1.msra.mxu0 0.0
    %1399 = vmatprep.subr.mxu0 0.0
    %1400 = vmatpush1.msra.mxu0 0.0
    %1401 = vmatprep.subr.mxu0 0.0
    %1402 = vmatpush1.msra.mxu0 0.0
    %1403 = vmatprep.subr.mxu0 0.0
    %1404 = vmatpush1.msra.mxu0 0.0
    %1405 = vmatprep.subr.mxu0 0.0
    %1406 = vmatpush1.msra.mxu0 0.0
    %1407 = vmatprep.subr.mxu0 0.0
    %1408 = vmatpush1.msra.mxu0 0.0
    %1409 = vmatprep.subr.mxu0 0.0
    %1410 = vmatpush1.msra.mxu0 0.0
    %1411 = vmatprep.subr.mxu0 0.0
    %1412 = vmatpush1.msra.mxu0 0.0
    %1413 = vmatprep.subr.mxu0 0.0
    %1414 = vmatpush1.msra.mxu0 0.0
    %1415 = vmatprep.subr.mxu0 0.0
    %1416 = vmatpush1.msra.mxu0 0.0
    %1417 = vmatprep.subr.mxu0 0.0
    %1418 = vmatpush1.msra.mxu0 0.0
    %1419 = vmatprep.subr.mxu0 0.0
    %1420 = vmatpush1.msra.mxu0 0.0
    %1421 = vmatprep.subr.mxu0 0.0
    %1422 = vmatpush1.msra.mxu0 0.0
    %1423 = vmatprep.subr.mxu0 0.0
    %1424 = vmatpush1.msra.mxu0 0.0
    %1425 = vmatprep.subr.mxu0 0.0
    %1426 = vmatpush1.msra.mxu0 0.0
    %1427 = vmatprep.subr.mxu0 0.0
    %1428 = vmatpush1.msra.mxu0 0.0
    %1429 = vmatprep.subr.mxu0 0.0
    %1430 = vmatpush1.msra.mxu0 0.0
    %1431 = vmatprep.subr.mxu0 0.0
    %1432 = vmatpush1.msra.mxu0 0.0
    %1433 = vmatprep.subr.mxu0 0.0
    %1434 = vmatpush1.msra.mxu0 0.0
    %1435 = vmatprep.subr.mxu0 0.0
    %1436 = vmatpush1.msra.mxu0 0.0
    %1437 = vmatprep.subr.mxu0 0.0
    %1438 = vmatpush1.msra.mxu0 0.0
    %1439 = vmatprep.subr.mxu0 0.0
    %1440 = vmatpush1.msra.mxu0 0.0
    %1441 = vmatprep.subr.mxu0 0.0
    %1442 = vmatpush1.msra.mxu0 0.0
    %1443 = vmatprep.mubr.f32.mxu0 0.0
    %1444 = vmatmul.mubr.f32.gmra.mrb[0].mxu0 %v1377
    %v1445 = vpop.f32.mrb[0].mxu0
    %v1446 = vadd.f32 %v1373, %v1445
    %v1447 = vpop.f32.mrb[0].mxu0
    %1448 = vdwg.mxu0
    %s1449 = scalar_lea.vmem %s9, 112
    %v1450 = vld [vmem:[%s1449] sm:$0xff]
    %v1451 = vld [vmem:[%s1449 + $0x8] sm:$0xff]
    %v1452 = vld [vmem:[%s1449 + $0x10] sm:$0xff]
    %v1453 = vld [vmem:[%s1449 + $0x18] sm:$0xff]
    %v1454 = vld [vmem:[%s1449 + $0x20] sm:$0xff]
    %v1455 = vld [vmem:[%s1449 + $0x28] sm:$0xff]
    %v1456 = vld [vmem:[%s1449 + $0x30] sm:$0xff]
    %1457 = vmatprep.subr.mxu0 0.0
    %1458 = vmatpush1.msra.mxu0 %v1450
    %1459 = vmatprep.subr.mxu0 0.0
    %1460 = vmatpush1.msra.mxu0 %v1451
    %1461 = vmatprep.subr.mxu0 0.0
    %1462 = vmatpush1.msra.mxu0 %v1452
    %1463 = vmatprep.subr.mxu0 0.0
    %1464 = vmatpush1.msra.mxu0 %v1453
    %1465 = vmatprep.subr.mxu0 0.0
    %1466 = vmatpush1.msra.mxu0 %v1454
    %1467 = vmatprep.subr.mxu0 0.0
    %1468 = vmatpush1.msra.mxu0 %v1455
    %1469 = vmatprep.subr.mxu0 0.0
    %1470 = vmatpush1.msra.mxu0 %v1456
    %1471 = vmatprep.subr.mxu0 0.0
    %1472 = vmatpush1.msra.mxu0 0.0
    %1473 = vmatprep.subr.mxu0 0.0
    %1474 = vmatpush1.msra.mxu0 0.0
    %1475 = vmatprep.subr.mxu0 0.0
    %1476 = vmatpush1.msra.mxu0 0.0
    %1477 = vmatprep.subr.mxu0 0.0
    %1478 = vmatpush1.msra.mxu0 0.0
    %1479 = vmatprep.subr.mxu0 0.0
    %1480 = vmatpush1.msra.mxu0 0.0
    %1481 = vmatprep.subr.mxu0 0.0
    %1482 = vmatpush1.msra.mxu0 0.0
    %1483 = vmatprep.subr.mxu0 0.0
    %1484 = vmatpush1.msra.mxu0 0.0
    %1485 = vmatprep.subr.mxu0 0.0
    %1486 = vmatpush1.msra.mxu0 0.0
    %1487 = vmatprep.subr.mxu0 0.0
    %1488 = vmatpush1.msra.mxu0 0.0
    %1489 = vmatprep.subr.mxu0 0.0
    %1490 = vmatpush1.msra.mxu0 0.0
    %1491 = vmatprep.subr.mxu0 0.0
    %1492 = vmatpush1.msra.mxu0 0.0
    %1493 = vmatprep.subr.mxu0 0.0
    %1494 = vmatpush1.msra.mxu0 0.0
    %1495 = vmatprep.subr.mxu0 0.0
    %1496 = vmatpush1.msra.mxu0 0.0
    %1497 = vmatprep.subr.mxu0 0.0
    %1498 = vmatpush1.msra.mxu0 0.0
    %1499 = vmatprep.subr.mxu0 0.0
    %1500 = vmatpush1.msra.mxu0 0.0
    %1501 = vmatprep.subr.mxu0 0.0
    %1502 = vmatpush1.msra.mxu0 0.0
    %1503 = vmatprep.subr.mxu0 0.0
    %1504 = vmatpush1.msra.mxu0 0.0
    %1505 = vmatprep.subr.mxu0 0.0
    %1506 = vmatpush1.msra.mxu0 0.0
    %1507 = vmatprep.subr.mxu0 0.0
    %1508 = vmatpush1.msra.mxu0 0.0
    %1509 = vmatprep.subr.mxu0 0.0
    %1510 = vmatpush1.msra.mxu0 0.0
    %1511 = vmatprep.subr.mxu0 0.0
    %1512 = vmatpush1.msra.mxu0 0.0
    %1513 = vmatprep.subr.mxu0 0.0
    %1514 = vmatpush1.msra.mxu0 0.0
    %1515 = vmatprep.subr.mxu0 0.0
    %1516 = vmatpush1.msra.mxu0 0.0
    %1517 = vmatprep.subr.mxu0 0.0
    %1518 = vmatpush1.msra.mxu0 0.0
    %1519 = vmatprep.subr.mxu0 0.0
    %1520 = vmatpush1.msra.mxu0 0.0
    %1521 = vmatprep.mubr.f32.mxu0 0.0
    %1522 = vmatmul.mubr.f32.gmra.mrb[0].mxu0 %v1149
    %v1523 = vpop.f32.mrb[0].mxu0
    %v1524 = vadd.f32 0.0, %v1523
    %v1525 = vpop.f32.mrb[0].mxu0
    %1526 = vdwg.mxu0
    %s1527 = scalar_lea.vmem [#allocation7], 8
    %v1528 = vld [vmem:[%s1527] sm:$0xf]
    %v1530 = vsel %vm1302, %v1528, 0
    %1532 = vmatprep.subr.mxu0 0.0
    %1533 = vmatpush1.msra.mxu0 %v1524
    %1534 = vmatprep.subr.mxu0 0.0
    %1535 = vmatpush1.msra.mxu0 0.0
    %1536 = vmatprep.subr.mxu0 0.0
    %1537 = vmatpush1.msra.mxu0 0.0
    %1538 = vmatprep.subr.mxu0 0.0
    %1539 = vmatpush1.msra.mxu0 0.0
    %1540 = vmatprep.subr.mxu0 0.0
    %1541 = vmatpush1.msra.mxu0 0.0
    %1542 = vmatprep.subr.mxu0 0.0
    %1543 = vmatpush1.msra.mxu0 0.0
    %1544 = vmatprep.subr.mxu0 0.0
    %1545 = vmatpush1.msra.mxu0 0.0
    %1546 = vmatprep.subr.mxu0 0.0
    %1547 = vmatpush1.msra.mxu0 0.0
    %1548 = vmatprep.subr.mxu0 0.0
    %1549 = vmatpush1.msra.mxu0 0.0
    %1550 = vmatprep.subr.mxu0 0.0
    %1551 = vmatpush1.msra.mxu0 0.0
    %1552 = vmatprep.subr.mxu0 0.0
    %1553 = vmatpush1.msra.mxu0 0.0
    %1554 = vmatprep.subr.mxu0 0.0
    %1555 = vmatpush1.msra.mxu0 0.0
    %1556 = vmatprep.subr.mxu0 0.0
    %1557 = vmatpush1.msra.mxu0 0.0
    %1558 = vmatprep.subr.mxu0 0.0
    %1559 = vmatpush1.msra.mxu0 0.0
    %1560 = vmatprep.subr.mxu0 0.0
    %1561 = vmatpush1.msra.mxu0 0.0
    %1562 = vmatprep.subr.mxu0 0.0
    %1563 = vmatpush1.msra.mxu0 0.0
    %1564 = vmatprep.subr.mxu0 0.0
    %1565 = vmatpush1.msra.mxu0 0.0
    %1566 = vmatprep.subr.mxu0 0.0
    %1567 = vmatpush1.msra.mxu0 0.0
    %1568 = vmatprep.subr.mxu0 0.0
    %1569 = vmatpush1.msra.mxu0 0.0
    %1570 = vmatprep.subr.mxu0 0.0
    %1571 = vmatpush1.msra.mxu0 0.0
    %1572 = vmatprep.subr.mxu0 0.0
    %1573 = vmatpush1.msra.mxu0 0.0
    %1574 = vmatprep.subr.mxu0 0.0
    %1575 = vmatpush1.msra.mxu0 0.0
    %1576 = vmatprep.subr.mxu0 0.0
    %1577 = vmatpush1.msra.mxu0 0.0
    %1578 = vmatprep.subr.mxu0 0.0
    %1579 = vmatpush1.msra.mxu0 0.0
    %1580 = vmatprep.subr.mxu0 0.0
    %1581 = vmatpush1.msra.mxu0 0.0
    %1582 = vmatprep.subr.mxu0 0.0
    %1583 = vmatpush1.msra.mxu0 0.0
    %1584 = vmatprep.subr.mxu0 0.0
    %1585 = vmatpush1.msra.mxu0 0.0
    %1586 = vmatprep.subr.mxu0 0.0
    %1587 = vmatpush1.msra.mxu0 0.0
    %1588 = vmatprep.subr.mxu0 0.0
    %1589 = vmatpush1.msra.mxu0 0.0
    %1590 = vmatprep.subr.mxu0 0.0
    %1591 = vmatpush1.msra.mxu0 0.0
    %1592 = vmatprep.subr.mxu0 0.0
    %1593 = vmatpush1.msra.mxu0 0.0
    %1594 = vmatprep.subr.mxu0 0.0
    %1595 = vmatpush1.msra.mxu0 0.0
    %1596 = vmatprep.mubr.f32.mxu0 0.0
    %1597 = vmatmul.mubr.f32.gmra.mrb[0].mxu0 %v1530
    %v1598 = vpop.f32.mrb[0].mxu0
    %v1599 = vadd.f32 0.0, %v1598
    %v1600 = vpop.f32.mrb[0].mxu0
    %1601 = vdwg.mxu0
    %v1602 = vadd.f32 %v1446, %v1599
    %v1603 = vld [vmem:[%s8] sm:$0xf]
    %1605 = vset.pattern.permute.xlu0 0
    %1606 = vperm.xlu0 %1605, %v1603
    %v1607 = vpop.permute.xlu0 %1606
    %v1609 = vadd.f32 %v1602, %v1607
    %v1610 = vmax.f32 %v1609, 0.0
    %v1611 = vld [vmem:[#allocation9] sm:$0xff]
    %v1612 = vld [vmem:[#allocation9 + $0x8] sm:$0xff]
    %v1613 = vld [vmem:[#allocation9 + $0x10] sm:$0xff]
    %v1614 = vld [vmem:[#allocation9 + $0x18] sm:$0xff]
    %v1615 = vld [vmem:[#allocation9 + $0x20] sm:$0xff]
    %v1616 = vld [vmem:[#allocation9 + $0x28] sm:$0xff]
    %v1617 = vld [vmem:[#allocation9 + $0x30] sm:$0xff]
    %v1618 = vld [vmem:[#allocation9 + $0x38] sm:$0xff]
    %v1619 = vld [vmem:[#allocation9 + $0x40] sm:$0xff]
    %v1620 = vld [vmem:[#allocation9 + $0x48] sm:$0xff]
    %v1621 = vld [vmem:[#allocation9 + $0x50] sm:$0xff]
    %v1622 = vld [vmem:[#allocation9 + $0x58] sm:$0xff]
    %v1623 = vld [vmem:[#allocation9 + $0x60] sm:$0xff]
    %v1624 = vld [vmem:[#allocation9 + $0x68] sm:$0xff]
    %v1625 = vld [vmem:[#allocation9 + $0x70] sm:$0xff]
    %v1626 = vld [vmem:[#allocation9 + $0x78] sm:$0xff]
    %v1627 = vld [vmem:[#allocation9 + $0x80] sm:$0xff]
    %v1628 = vld [vmem:[#allocation9 + $0x88] sm:$0xff]
    %v1629 = vld [vmem:[#allocation9 + $0x90] sm:$0xff]
    %v1630 = vld [vmem:[#allocation9 + $0x98] sm:$0xff]
    %v1631 = vld [vmem:[#allocation9 + $0xa0] sm:$0xff]
    %v1632 = vld [vmem:[#allocation9 + $0xa8] sm:$0xff]
    %v1633 = vld [vmem:[#allocation9 + $0xb0] sm:$0xff]
    %v1634 = vld [vmem:[#allocation9 + $0xb8] sm:$0xff]
    %v1635 = vld [vmem:[#allocation9 + $0xc0] sm:$0xff]
    %v1636 = vld [vmem:[#allocation9 + $0xc8] sm:$0xff]
    %v1637 = vld [vmem:[#allocation9 + $0xd0] sm:$0xff]
    %v1638 = vld [vmem:[#allocation9 + $0xd8] sm:$0xff]
    %v1639 = vld [vmem:[#allocation9 + $0xe0] sm:$0xff]
    %v1640 = vld [vmem:[#allocation9 + $0xe8] sm:$0xff]
    %vm1641 = vcmask 982016
    %v1643 = vsel %vm1641, %v1610, 0
    %1645 = vmatprep.subr.mxu0 %v1612
    %1646 = vmatpush1.msra.mxu0 %v1611
    %1647 = vmatprep.subr.mxu0 %v1614
    %1648 = vmatpush1.msra.mxu0 %v1613
    %1649 = vmatprep.subr.mxu0 %v1616
    %1650 = vmatpush1.msra.mxu0 %v1615
    %1651 = vmatprep.subr.mxu0 %v1618
    %1652 = vmatpush1.msra.mxu0 %v1617
    %1653 = vmatprep.subr.mxu0 %v1620
    %1654 = vmatpush1.msra.mxu0 %v1619
    %1655 = vmatprep.subr.mxu0 %v1622
    %1656 = vmatpush1.msra.mxu0 %v1621
    %1657 = vmatprep.subr.mxu0 %v1624
    %1658 = vmatpush1.msra.mxu0 %v1623
    %1659 = vmatprep.subr.mxu0 %v1626
    %1660 = vmatpush1.msra.mxu0 %v1625
    %1661 = vmatprep.subr.mxu0 %v1628
    %1662 = vmatpush1.msra.mxu0 %v1627
    %1663 = vmatprep.subr.mxu0 %v1630
    %1664 = vmatpush1.msra.mxu0 %v1629
    %1665 = vmatprep.subr.mxu0 %v1632
    %1666 = vmatpush1.msra.mxu0 %v1631
    %1667 = vmatprep.subr.mxu0 %v1634
    %1668 = vmatpush1.msra.mxu0 %v1633
    %1669 = vmatprep.subr.mxu0 %v1636
    %1670 = vmatpush1.msra.mxu0 %v1635
    %1671 = vmatprep.subr.mxu0 %v1638
    %1672 = vmatpush1.msra.mxu0 %v1637
    %1673 = vmatprep.subr.mxu0 %v1640
    %1674 = vmatpush1.msra.mxu0 %v1639
    %1675 = vmatprep.subr.mxu0 0.0
    %1676 = vmatpush1.msra.mxu0 0.0
    %1677 = vmatprep.subr.mxu0 0.0
    %1678 = vmatpush1.msra.mxu0 0.0
    %1679 = vmatprep.subr.mxu0 0.0
    %1680 = vmatpush1.msra.mxu0 0.0
    %1681 = vmatprep.subr.mxu0 0.0
    %1682 = vmatpush1.msra.mxu0 0.0
    %1683 = vmatprep.subr.mxu0 0.0
    %1684 = vmatpush1.msra.mxu0 0.0
    %1685 = vmatprep.subr.mxu0 0.0
    %1686 = vmatpush1.msra.mxu0 0.0
    %1687 = vmatprep.subr.mxu0 0.0
    %1688 = vmatpush1.msra.mxu0 0.0
    %1689 = vmatprep.subr.mxu0 0.0
    %1690 = vmatpush1.msra.mxu0 0.0
    %1691 = vmatprep.subr.mxu0 0.0
    %1692 = vmatpush1.msra.mxu0 0.0
    %1693 = vmatprep.subr.mxu0 0.0
    %1694 = vmatpush1.msra.mxu0 0.0
    %1695 = vmatprep.subr.mxu0 0.0
    %1696 = vmatpush1.msra.mxu0 0.0
    %1697 = vmatprep.subr.mxu0 0.0
    %1698 = vmatpush1.msra.mxu0 0.0
    %1699 = vmatprep.subr.mxu0 0.0
    %1700 = vmatpush1.msra.mxu0 0.0
    %1701 = vmatprep.subr.mxu0 0.0
    %1702 = vmatpush1.msra.mxu0 0.0
    %1703 = vmatprep.subr.mxu0 0.0
    %1704 = vmatpush1.msra.mxu0 0.0
    %1705 = vmatprep.subr.mxu0 0.0
    %1706 = vmatpush1.msra.mxu0 0.0
    %1707 = vmatprep.subr.mxu0 0.0
    %1708 = vmatpush1.msra.mxu0 0.0
    %1709 = vmatprep.mubr.f32.mxu0 0.0
    %1710 = vmatmul.mubr.f32.gmra.mrb[0].mxu0 %v1643
    %v1711 = vpop.f32.mrb[0].mxu0
    %v1712 = vadd.f32 0.0, %v1711
    %v1713 = vpop.f32.mrb[0].mxu0
    %v1714 = vadd.f32 0.0, %v1713
    %1715 = vdwg.mxu0
    %v1718 = vcombine.low %v1712, %v1714
    %vm1720 = vcmask 1043456
    %vm1721 = vcmask 916484
    %vm1722 = vmor %vm1721, %vm1720
    %1723 = vst.msk [vmem:[%s11] sm:$0xff] %vm1722, %v1718
    // Predicated region
    $region66: #{fused_decoder.1} parent=1 // pred_check
      _
    $region67: #{fused_decoder.1} parent=1 // pred_check_branch
      %1725 = sbr.rel (0) target = $region69
    $region68: #{fused_decoder.1} parent=1 // pred_region
      _
    $region69: #{fused_decoder.1} parent=1 // pred_fallthru
      _
    // Predicated region
    $region70: #{fused_decoder.1} parent=1 // pred_check
      _
    $region71: #{fused_decoder.1} parent=1 // pred_check_branch
      %1727 = sbr.rel (0) target = $region73
    $region72: #{fused_decoder.1} parent=1 // pred_region
      _
    $region73: #{fused_decoder.1} parent=1 // pred_fallthru
      _
    %1728 = vsyncpa [#allocation3], 1
    %1729 = vsyncpa [#allocation5], 1
    %1730 = vsyncpa [#allocation8], 1

</llo_original>
